<compile_context>
chip_gen: v6e
topology: v6e:2x2x1
jax: 0.10.0
libtpu: 0.0.40
codegen_flags: <defaults>
</compile_context>

<pallas_src>
import functools

import numpy as np

import jax
import jax.numpy as jnp
from jax.experimental import pallas as pl
from jax.experimental.pallas import tpu as pltpu


def _round_up(x, m):
    return ((x + m - 1) // m) * m


# ---------------------------------------------------------------------------
# Kernel bodies
# ---------------------------------------------------------------------------
def _cnn_core(emb, convw_ref, convb_ref, fcw_ref, fcb_ref, o_ref,
              *, filters, filter_num, t_doc):
    """Shared body: fused conv -> prefix-max pool -> bias+relu -> fc -> log_softmax.

    emb       : (TB, T_need, D) embedded doc tile (MXU dtype), time padded to
                T_need = (t_doc - min(filters) + 1) + max(filters) - 1.  The
                padded tail rows may hold ARBITRARY values: valid pooled
                positions only reach them through zero-padded weight taps, and
                positions that genuinely read them are discarded by the
                per-group prefix max below.
    convw_ref : (maxF*D, N_total) merged conv bank, taps zero-padded per filter
    convb_ref : (1, N_total)      merged conv bias (f32)
    fcw_ref   : (N_total, C_pad)  fc weight, zero-padded to 128 output lanes
    fcb_ref   : (1, C_pad)        fc bias, -1e30 on padded lanes (f32)
    o_ref     : (TB, C_pad)       log-probs (f32)
    """
    maxF = max(filters)
    minF = min(filters)
    T_pos = t_doc - minF + 1
    TB, T_need, D = emb.shape
    assert T_need == T_pos + maxF - 1, "time axis must be padded to T_pos + maxF - 1"

    # Fused window operand (TB, T_pos, maxF*D): cheap shifted-slice concat; the
    # single contraction below then uses K = maxF*D MXU rows instead of maxF
    # underfilled K = D matmuls + (maxF-1) full VPU adds over the activation.
    windows = jnp.concatenate(
        [emb[:, tap:tap + T_pos, :] for tap in range(maxF)], axis=2)

    s = jax.lax.dot_general(
        windows, convw_ref[...],
        dimension_numbers=(((2,), (0,)), ((), ())),
        preferred_element_type=jnp.float32)              # (TB, T_pos, N_total) f32

    # Prefix-max pooling per filter group over STATIC temporal slices: no iota,
    # no -inf mask, no captured constants.  T_f = t_doc - f + 1 is a
    # compile-time constant per group; the group select happens on the tiny
    # pooled tensors, not on the (TB, T_pos, N_total) activation.
    parts = []
    col = 0
    for f, fn in zip(filters, filter_num):
        T_f = t_doc - f + 1
        parts.append(jnp.max(s[:, :T_f, col:col + fn], axis=1))
        col += fn
    pooled = jnp.concatenate(parts, axis=-1)             # (TB, N_total) f32

    # Bias after pool + relu == max_t(relu(conv_t + b)): bias is time-invariant
    # and relu is monotone.  If the activation ever changes, move the bias back.
    feat = jnp.maximum(pooled + convb_ref[...], 0.0)     # (TB, N_total) f32

    # Dropout is identity in eval mode.
    # TODO(synk): training-mode dropout (p=args['dropOut']) not applied.
    z = jnp.dot(feat.astype(fcw_ref.dtype), fcw_ref[...],
                preferred_element_type=jnp.float32) + fcb_ref[...]
    m = jnp.max(z, axis=-1, keepdims=True)
    e = jnp.exp(z - m)
    lse = m + jnp.log(jnp.sum(e, axis=-1, keepdims=True))
    o_ref[...] = (z - lse).astype(o_ref.dtype)


def _kernel_gather(tok_ref, table_ref, convw_ref, convb_ref, fcw_ref, fcb_ref,
                   o_ref, *, filters, filter_num, t_doc):
    """In-kernel embedding gather (small vocab): one-hot matmul against the
    VMEM-resident table, then the shared CNN core.  Avoids the HBM round-trip
    of a host-side gathered/padded (B, T, D) tensor entirely."""
    table = table_ref[...]                               # (W, D)  MXU dtype
    ids = tok_ref[...]                                   # (TB, T_need, 1) int32
    TB, T_need, _ = ids.shape
    W = table.shape[0]
    iota_w = jax.lax.broadcasted_iota(jnp.int32, (TB, T_need, W), 2)
    one_hot = (ids == iota_w).astype(table.dtype)        # minor-dim broadcast 1 -> W
    emb = jax.lax.dot_general(
        one_hot, table,
        dimension_numbers=(((2,), (0,)), ((), ())),
        preferred_element_type=jnp.float32).astype(table.dtype)   # (TB, T_need, D)
    _cnn_core(emb, convw_ref, convb_ref, fcw_ref, fcb_ref, o_ref,
              filters=filters, filter_num=filter_num, t_doc=t_doc)


def _kernel_pregathered(emb_ref, convw_ref, convb_ref, fcw_ref, fcb_ref, o_ref,
                        *, filters, filter_num, t_doc):
    """Fallback (large vocab): the embedded doc was gathered on the host."""
    _cnn_core(emb_ref[...], convw_ref, convb_ref, fcw_ref, fcb_ref, o_ref,
              filters=filters, filter_num=filter_num, t_doc=t_doc)


# ---------------------------------------------------------------------------
# Parameter init (mirrors the PyTorch module's shapes)
# ---------------------------------------------------------------------------
def init_params(key, args):
    filters = args["filters"]
    filterNum = args["filterNum"]
    D = args["embeddingDim"]
    params = {}
    k_emb, k_fc_w, k_fc_b, *k_convs = jax.random.split(key, 3 + 2 * len(filters))
    params["embedding"] = (
        jax.random.normal(k_emb, (args["wordDim"], D), jnp.float32) * 0.1)
    params["convs"] = []
    for i, f in enumerate(filters):
        kw, kb = k_convs[2 * i], k_convs[2 * i + 1]
        K = f * D                                   # Conv1d kernel size
        # PyTorch weight is (filterNum[i], 1, K); stored transposed as (K, Fn).
        w = jax.random.normal(kw, (K, filterNum[i]), jnp.float32) * (1.0 / K) ** 0.5
        b = jax.random.normal(kb, (1, filterNum[i]), jnp.float32) * 0.01
        params["convs"].append((w, b))
    F_total = sum(filterNum)
    params["fc_w"] = (
        jax.random.normal(k_fc_w, (F_total, args["classSize"]), jnp.float32)
        * (1.0 / F_total) ** 0.5)
    params["fc_b"] = (
        jax.random.normal(k_fc_b, (1, args["classSize"]), jnp.float32) * 0.01)
    return params


# ---------------------------------------------------------------------------
# Forward wrapper: one fused pallas_call over a batch grid
# ---------------------------------------------------------------------------
def _vmem_cap_bytes():
    """Generation-aware scoped-VMEM cap (v7x: 64 MiB physical/TC; v5e/v6e: 128)."""
    try:
        cap = int(pltpu.get_tpu_info().vmem_capacity_bytes)
        return int(min(max(cap * 3 // 4, 32 * 2**20), 100 * 2**20))
    except Exception:
        return 48 * 2**20      # safe on every generation


def cnn_classifier_forward(params, token_ids, args, *,
                           mxu_dtype=jnp.bfloat16, batch_tile=None,
                           gather_in_kernel=None):
    """token_ids: (B, maxDocLength) int32.  Returns (B, classSize) log-probs (f32).

    mxu_dtype: dtype of MXU matmul operands (bf16 default: native MXU path on
    v6e/v7x and half the DMA bytes); accumulation and all elementwise math
    (relu / max / exp / log) stay float32.
    """
    filters = list(args["filters"])
    filter_num = list(args["filterNum"])
    D = args["embeddingDim"]
    T_doc = args["maxDocLength"]
    C = args["classSize"]
    W = args["wordDim"]
    B = token_ids.shape[0]

    assert T_doc >= max(filters), (
        "maxDocLength must be >= the longest conv filter (PyTorch would raise)")

    maxF, minF = max(filters), min(filters)
    T_pos = T_doc - minF + 1
    T_need = T_pos + maxF - 1          # padded time so every tap slice is in-bounds
    N_total = sum(filter_num)
    C_pad = _round_up(C, 128)
    isz = jnp.dtype(mxu_dtype).itemsize

    if gather_in_kernel is None:
        gather_in_kernel = W <= 1024   # small vocab: table stays resident in VMEM
    # TODO(synk): large-vocab path still materializes the gathered embedding in
    # HBM via jnp.take; a scalar-prefetched row gather / manual DMA would avoid it.

    # Merged conv bank (maxF*D, N_total): taps zero-padded per filter, so one
    # contraction computes every filter at once and padded taps contribute 0.
    w_blocks, b_blocks = [], []
    for (w, b), f in zip(params["convs"], filters):
        if f < maxF:
            w = jnp.pad(w, ((0, (maxF - f) * D), (0, 0)))
        w_blocks.append(w)
        b_blocks.append(b)
    conv_w = jnp.concatenate(w_blocks, axis=1).astype(mxu_dtype)   # (maxF*D, N_total)
    conv_b = jnp.concatenate(b_blocks, axis=1)                     # (1, N_total) f32

    # fc head padded to 128 output lanes: lane-dense final matmul + unmasked
    # output stores; -1e30 padded bias keeps log_softmax over real classes exact.
    fc_w = jnp.pad(params["fc_w"], ((0, 0), (0, C_pad - C))).astype(mxu_dtype)
    fc_b = jnp.pad(params["fc_b"], ((0, 0), (0, C_pad - C)), constant_values=-1e30)

    # ---- lane/sublane-padded VMEM estimate ((8,128) f32/i32 tiles, (16,128) bf16).
    def _lp(n):
        return _round_up(n, 128)

    def _sp(n, item):
        return _round_up(n, 16 if item == 2 else 8)

    def est_bytes(tb):
        e = 0
        if gather_in_kernel:
            e += 2 * tb * _sp(T_need, 4) * _lp(1) * 4         # token-id block (x2 buf)
            e += 2 * _sp(W, isz) * _lp(D) * isz               # embedding table
            e += tb * _sp(T_need, isz) * _lp(W) * isz         # one-hot intermediate
            e += tb * _sp(T_need, isz) * _lp(D) * (4 + isz)   # gathered emb f32 + cast
        else:
            e += 2 * tb * _sp(T_need, isz) * _lp(D) * isz     # pre-gathered emb block
        e += 2 * _sp(maxF * D, isz) * _lp(N_total) * isz      # conv bank
        e += 2 * 8 * _lp(N_total) * 4                         # conv bias
        e += 2 * _sp(N_total, isz) * _lp(C_pad) * isz         # fc weight
        e += 2 * 8 * _lp(C_pad) * 4                           # fc bias
        e += 2 * _sp(tb, 4) * _lp(C_pad) * 4                  # output block
        e += tb * _sp(T_pos, isz) * _lp(maxF * D) * isz       # window operand
        e += tb * _sp(T_pos, 4) * _lp(N_total) * 4            # conv activation (f32)
        e += 4 * tb * (_lp(N_total) + _lp(C_pad)) * 4         # pooled/feat/z temps
        return e

    cap = _vmem_cap_bytes()
    budget = cap // 2
    if batch_tile is None:
        cands = [c for c in (512, 256, 128, 64, 32, 16, 8)
                 if c <= max(8, _round_up(B, 8))]
        fitting = [c for c in cands if est_bytes(c) <= budget] or [8]
        TB = fitting[0]
        # Prefer >= 2 grid steps so the single "parallel" axis can feed both of
        # v7x's TensorCores (harmless on v5e/v6e's single core).
        if _round_up(B, TB) // TB < 2:
            for c in fitting:
                if _round_up(B, c) // c >= 2:
                    TB = c
                    break
    else:
        TB = max(8, _round_up(batch_tile, 8))
    B_pad = _round_up(B, TB)
    grid = (B_pad // TB,)
    vmem_limit = int(min(max(2 * est_bytes(TB), 16 * 2**20), cap))

    common_specs = [
        pl.BlockSpec((maxF * D, N_total), lambda i: (0, 0)),   # conv_w
        pl.BlockSpec((1, N_total), lambda i: (0, 0)),          # conv_b
        pl.BlockSpec((N_total, C_pad), lambda i: (0, 0)),      # fc_w
        pl.BlockSpec((1, C_pad), lambda i: (0, 0)),            # fc_b
    ]
    # TODO(synk): mark the grid-invariant weight specs single-buffered
    # (pipeline_mode=pl.Buffered(1)) once that is robust across jax versions;
    # their double-buffered footprint is already accounted for in est_bytes.

    if gather_in_kernel:
        # Token ids passed as (B_pad, T_need, 1): the size-1 lane dim keeps every
        # in-kernel op a plain minor-dim broadcast (no lane<->sublane relayout).
        # Padded rows/positions use index 0 -- harmless: they only ever meet the
        # zero-padded weight taps or feed pooled positions that are discarded.
        tok = token_ids.astype(jnp.int32)[:, :, None]
        tok = jnp.pad(tok, ((0, B_pad - B), (0, T_need - T_doc), (0, 0)))
        table = params["embedding"].astype(mxu_dtype)
        kernel = functools.partial(
            _kernel_gather, filters=tuple(filters),
            filter_num=tuple(filter_num), t_doc=T_doc)
        in_specs = [
            pl.BlockSpec((TB, T_need, 1), lambda i: (i, 0, 0)),  # token ids
            pl.BlockSpec((W, D), lambda i: (0, 0)),              # embedding table
        ] + common_specs
        operands = (tok, table, conv_w, conv_b, fc_w, fc_b)
    else:
        emb = jnp.take(params["embedding"], token_ids, axis=0)   # (B, T_doc, D)
        emb = jnp.pad(emb, ((0, B_pad - B), (0, T_need - T_doc), (0, 0)))
        emb = emb.astype(mxu_dtype)
        kernel = functools.partial(
            _kernel_pregathered, filters=tuple(filters),
            filter_num=tuple(filter_num), t_doc=T_doc)
        in_specs = [
            pl.BlockSpec((TB, T_need, D), lambda i: (i, 0, 0)),  # embedded doc
        ] + common_specs
        operands = (emb, conv_w, conv_b, fc_w, fc_b)

    out = pl.pallas_call(
        kernel,
        out_shape=jax.ShapeDtypeStruct((B_pad, C_pad), jnp.float32),
        grid_spec=pltpu.PrefetchScalarGridSpec(
            num_scalar_prefetch=0,
            grid=grid,
            in_specs=in_specs,
            out_specs=pl.BlockSpec((TB, C_pad), lambda i: (i, 0)),
        ),
        compiler_params=pltpu.CompilerParams(
            dimension_semantics=("parallel",),
            vmem_limit_bytes=vmem_limit,
        ),
    )(*operands)

    return out[:B, :C]


# ---------------------------------------------------------------------------
# Pure-numpy float64 reference (precision-mode independent correctness check)
# ---------------------------------------------------------------------------
def reference_forward_np(params, token_ids, args):
    filters = args["filters"]
    D = args["embeddingDim"]
    T = args["maxDocLength"]
    emb_tab = np.asarray(params["embedding"], np.float64)
    ids = np.asarray(token_ids)
    B = ids.shape[0]
    flat = emb_tab[ids].reshape(B, T * D)
    feats = []
    for i, f in enumerate(filters):
        w = np.asarray(params["convs"][i][0], np.float64)    # (f*D, Fn)
        b = np.asarray(params["convs"][i][1], np.float64)    # (1, Fn)
        T_f = T - f + 1
        wins = np.stack([flat[:, t * D:(t + f) * D] for t in range(T_f)], axis=1)
        s = np.maximum(wins @ w + b, 0.0)
        feats.append(s.max(axis=1))
    x = np.concatenate(feats, axis=1)
    z = x @ np.asarray(params["fc_w"], np.float64) + np.asarray(params["fc_b"], np.float64)
    z = z - z.max(axis=1, keepdims=True)
    return z - np.log(np.exp(z).sum(axis=1, keepdims=True))


# ---------------------------------------------------------------------------
if __name__ == "__main__":
    args = {
        "filters": [2, 3, 4],
        "filterNum": [4, 4, 4],
        "maxDocLength": 8,
        "wordDim": 50,
        "embeddingDim": 32,
        "classSize": 3,
        "dropOut": 0.5,
    }

    key = jax.random.PRNGKey(0)
    k_params, k_ids = jax.random.split(key)
    params = init_params(k_params, args)

    batch = 2
    token_ids = jax.random.randint(
        k_ids, (batch, args["maxDocLength"]), 0, args["wordDim"], dtype=jnp.int32)

    ref = reference_forward_np(params, token_ids, args)

    # 1) f32 MXU operands, in-kernel embedding gather.
    fwd_f32 = jax.jit(functools.partial(cnn_classifier_forward, args=args,
                                        mxu_dtype=jnp.float32))
    out_f32 = jax.block_until_ready(fwd_f32(params, token_ids))
    assert out_f32.shape == (batch, args["classSize"])
    assert np.allclose(np.asarray(out_f32), ref, atol=5e-3, rtol=5e-3), \
        "f32 kernel mismatch vs reference"

    # 2) Default bf16 MXU operands (recommended on v6e/v7x; f32 accumulation).
    out_bf16 = jax.block_until_ready(cnn_classifier_forward(params, token_ids, args))
    assert out_bf16.shape == (batch, args["classSize"])
    assert np.allclose(np.asarray(out_bf16), ref, atol=1e-1, rtol=1e-1), \
        "bf16 kernel mismatch vs reference"

    # 3) Large-vocab fallback path (host-side gather, pre-embedded block).
    out_pg = jax.block_until_ready(
        cnn_classifier_forward(params, token_ids, args,
                               mxu_dtype=jnp.float32, gather_in_kernel=False))
    assert np.allclose(np.asarray(out_pg), ref, atol=5e-3, rtol=5e-3), \
        "pre-gathered path mismatch vs reference"

    print("KERNEL_OK")
</pallas_src>

<mosaic_0001>
module attributes {stable_mosaic.version = 11 : i64} {
  func.func @_kernel_gather(%arg0: i32, %arg1: memref<8x10x1xi32, #tpu.memory_space<vmem>>, %arg2: memref<50x32xf32, #tpu.memory_space<vmem>>, %arg3: memref<128x12xf32, #tpu.memory_space<vmem>>, %arg4: memref<1x12xf32, #tpu.memory_space<vmem>>, %arg5: memref<12x128xf32, #tpu.memory_space<vmem>>, %arg6: memref<1x128xf32, #tpu.memory_space<vmem>>, %arg7: memref<8x128xf32, #tpu.memory_space<vmem>>) attributes {dimension_semantics = [#tpu.dimension_semantics<parallel>], iteration_bounds = array<i64: 1>, scalar_prefetch = 0 : i64, scratch_operands = 0 : i64, tpu.core_type = #tpu.core_type<tc>, window_params = [{transform_indices = @transform_0, window_bounds = array<i64: 8, 10, 1>}, {pipeline_mode = #tpu.pipeline_mode<synchronous>, transform_indices = @transform_1, window_bounds = array<i64: 50, 32>}, {pipeline_mode = #tpu.pipeline_mode<synchronous>, transform_indices = @transform_2, window_bounds = array<i64: 128, 12>}, {pipeline_mode = #tpu.pipeline_mode<synchronous>, transform_indices = @transform_3, window_bounds = array<i64: 1, 12>}, {pipeline_mode = #tpu.pipeline_mode<synchronous>, transform_indices = @transform_4, window_bounds = array<i64: 12, 128>}, {pipeline_mode = #tpu.pipeline_mode<synchronous>, transform_indices = @transform_5, window_bounds = array<i64: 1, 128>}, {transform_indices = @transform_6, window_bounds = array<i64: 8, 128>}]} {
    %c0 = arith.constant 0 : index
    %c0_0 = arith.constant 0 : index
    %0 = vector.load %arg2[%c0, %c0_0] : memref<50x32xf32, #tpu.memory_space<vmem>>, vector<50x32xf32>
    %c0_1 = arith.constant 0 : index
    %c0_2 = arith.constant 0 : index
    %c0_3 = arith.constant 0 : index
    %1 = vector.load %arg1[%c0_1, %c0_2, %c0_3] : memref<8x10x1xi32, #tpu.memory_space<vmem>>, vector<8x10x1xi32>
    %2 = tpu.iota {dimensions = array<i32: 2>} : vector<8x10x50xi32>
    %3 = vector.broadcast %1 : vector<8x10x1xi32> to vector<8x10x50xi32>
    %4 = arith.cmpi eq, %3, %2 : vector<8x10x50xi32>
    %5 = arith.extui %4 : vector<8x10x50xi1> to vector<8x10x50xi32>
    %6 = arith.sitofp %5 : vector<8x10x50xi32> to vector<8x10x50xf32>
    %cst = arith.constant dense<0.000000e+00> : vector<8x10x32xf32>
    %7 = tpu.matmul %6, %0, %cst {dimension_numbers = #tpu.dot_dimension_numbers<[2], [0], [0, 1], [1], [0, 0, 0, 1, 1, 1], [], []>} : vector<8x10x50xf32>, vector<50x32xf32>, vector<8x10x32xf32> -> vector<8x10x32xf32>
    %8 = vector.extract_strided_slice %7 {offsets = [0, 0, 0], sizes = [8, 7, 32], strides = [1, 1, 1]} : vector<8x10x32xf32> to vector<8x7x32xf32>
    %9 = vector.extract_strided_slice %7 {offsets = [0, 1, 0], sizes = [8, 7, 32], strides = [1, 1, 1]} : vector<8x10x32xf32> to vector<8x7x32xf32>
    %10 = vector.extract_strided_slice %7 {offsets = [0, 2, 0], sizes = [8, 7, 32], strides = [1, 1, 1]} : vector<8x10x32xf32> to vector<8x7x32xf32>
    %11 = vector.extract_strided_slice %7 {offsets = [0, 3, 0], sizes = [8, 7, 32], strides = [1, 1, 1]} : vector<8x10x32xf32> to vector<8x7x32xf32>
    %12 = tpu.concatenate %8, %9, %10, %11 in 2 : vector<8x7x32xf32>, vector<8x7x32xf32>, vector<8x7x32xf32>, vector<8x7x32xf32> -> vector<8x7x128xf32>
    %c0_4 = arith.constant 0 : index
    %c0_5 = arith.constant 0 : index
    %13 = vector.load %arg3[%c0_4, %c0_5] : memref<128x12xf32, #tpu.memory_space<vmem>>, vector<128x12xf32>
    %cst_6 = arith.constant dense<0.000000e+00> : vector<8x7x12xf32>
    %14 = tpu.matmul %12, %13, %cst_6 {dimension_numbers = #tpu.dot_dimension_numbers<[2], [0], [0, 1], [1], [0, 0, 0, 1, 1, 1], [], []>} : vector<8x7x128xf32>, vector<128x12xf32>, vector<8x7x12xf32> -> vector<8x7x12xf32>
    %15 = vector.extract_strided_slice %14 {offsets = [0, 0, 0], sizes = [8, 7, 4], strides = [1, 1, 1]} : vector<8x7x12xf32> to vector<8x7x4xf32>
    %cst_7 = arith.constant dense<0xFF800000> : vector<8x4xf32>
    %16 = vector.multi_reduction <maximumf>, %15, %cst_7 [1] : vector<8x7x4xf32> to vector<8x4xf32>
    %17 = vector.extract_strided_slice %14 {offsets = [0, 0, 4], sizes = [8, 6, 4], strides = [1, 1, 1]} : vector<8x7x12xf32> to vector<8x6x4xf32>
    %cst_8 = arith.constant dense<0xFF800000> : vector<8x4xf32>
    %18 = vector.multi_reduction <maximumf>, %17, %cst_8 [1] : vector<8x6x4xf32> to vector<8x4xf32>
    %19 = vector.extract_strided_slice %14 {offsets = [0, 0, 8], sizes = [8, 5, 4], strides = [1, 1, 1]} : vector<8x7x12xf32> to vector<8x5x4xf32>
    %cst_9 = arith.constant dense<0xFF800000> : vector<8x4xf32>
    %20 = vector.multi_reduction <maximumf>, %19, %cst_9 [1] : vector<8x5x4xf32> to vector<8x4xf32>
    %21 = tpu.concatenate %16, %18, %20 in 1 : vector<8x4xf32>, vector<8x4xf32>, vector<8x4xf32> -> vector<8x12xf32>
    %c0_10 = arith.constant 0 : index
    %c0_11 = arith.constant 0 : index
    %22 = vector.load %arg4[%c0_10, %c0_11] : memref<1x12xf32, #tpu.memory_space<vmem>>, vector<1x12xf32>
    %23 = vector.broadcast %22 : vector<1x12xf32> to vector<8x12xf32>
    %24 = arith.addf %21, %23 : vector<8x12xf32>
    %cst_12 = arith.constant 0.000000e+00 : f32
    %25 = vector.broadcast %cst_12 : f32 to vector<8x12xf32>
    %26 = arith.maximumf %24, %25 : vector<8x12xf32>
    %c0_13 = arith.constant 0 : index
    %c0_14 = arith.constant 0 : index
    %27 = vector.load %arg5[%c0_13, %c0_14] : memref<12x128xf32, #tpu.memory_space<vmem>>, vector<12x128xf32>
    %cst_15 = arith.constant dense<0.000000e+00> : vector<8x128xf32>
    %28 = tpu.matmul %26, %27, %cst_15 {dimension_numbers = #tpu.dot_dimension_numbers<[1], [0], [0], [1], [0, 0, 1, 1], [], []>} : vector<8x12xf32>, vector<12x128xf32>, vector<8x128xf32> -> vector<8x128xf32>
    %c0_16 = arith.constant 0 : index
    %c0_17 = arith.constant 0 : index
    %29 = vector.load %arg6[%c0_16, %c0_17] : memref<1x128xf32, #tpu.memory_space<vmem>>, vector<1x128xf32>
    %30 = vector.broadcast %29 : vector<1x128xf32> to vector<8x128xf32>
    %31 = arith.addf %28, %30 : vector<8x128xf32>
    %cst_18 = arith.constant dense<0xFF800000> : vector<8xf32>
    %32 = vector.multi_reduction <maximumf>, %31, %cst_18 [1] : vector<8x128xf32> to vector<8xf32>
    %33 = vector.shape_cast %32 : vector<8xf32> to vector<8x1xf32>
    %34 = vector.broadcast %33 : vector<8x1xf32> to vector<8x128xf32>
    %35 = arith.subf %31, %34 : vector<8x128xf32>
    %36 = math.exp %35 : vector<8x128xf32>
    %cst_19 = arith.constant dense<0.000000e+00> : vector<8xf32>
    %37 = vector.multi_reduction <add>, %36, %cst_19 [1] : vector<8x128xf32> to vector<8xf32>
    %38 = vector.shape_cast %37 : vector<8xf32> to vector<8x1xf32>
    %39 = math.log %38 : vector<8x1xf32>
    %40 = arith.addf %33, %39 : vector<8x1xf32>
    %41 = vector.broadcast %40 : vector<8x1xf32> to vector<8x128xf32>
    %42 = arith.subf %31, %41 : vector<8x128xf32>
    %c0_20 = arith.constant 0 : index
    %c0_21 = arith.constant 0 : index
    %43 = vector.load %arg7[%c0_20, %c0_21] : memref<8x128xf32, #tpu.memory_space<vmem>>, vector<8x128xf32>
    tpu.vector_store %arg7[%c0_20, %c0_21], %42 {strides = array<i32>} : memref<8x128xf32, #tpu.memory_space<vmem>>, vector<8x128xf32>,
    return
  }
  func.func @transform_0(%arg0: i32) -> (i32, i32, i32) {
    %c0_i32 = arith.constant 0 : i32
    %c0_i32_0 = arith.constant 0 : i32
    %c0_i32_1 = arith.constant 0 : i32
    return %arg0, %c0_i32, %c0_i32_0 : i32, i32, i32
  }
  func.func @transform_1(%arg0: i32) -> (i32, i32) {
    %c0_i32 = arith.constant 0 : i32
    %c0_i32_0 = arith.constant 0 : i32
    %c0_i32_1 = arith.constant 0 : i32
    return %c0_i32, %c0_i32_0 : i32, i32
  }
  func.func @transform_2(%arg0: i32) -> (i32, i32) {
    %c0_i32 = arith.constant 0 : i32
    %c0_i32_0 = arith.constant 0 : i32
    %c0_i32_1 = arith.constant 0 : i32
    return %c0_i32, %c0_i32_0 : i32, i32
  }
  func.func @transform_3(%arg0: i32) -> (i32, i32) {
    %c0_i32 = arith.constant 0 : i32
    %c0_i32_0 = arith.constant 0 : i32
    %c0_i32_1 = arith.constant 0 : i32
    return %c0_i32, %c0_i32_0 : i32, i32
  }
  func.func @transform_4(%arg0: i32) -> (i32, i32) {
    %c0_i32 = arith.constant 0 : i32
    %c0_i32_0 = arith.constant 0 : i32
    %c0_i32_1 = arith.constant 0 : i32
    return %c0_i32, %c0_i32_0 : i32, i32
  }
  func.func @transform_5(%arg0: i32) -> (i32, i32) {
    %c0_i32 = arith.constant 0 : i32
    %c0_i32_0 = arith.constant 0 : i32
    %c0_i32_1 = arith.constant 0 : i32
    return %c0_i32, %c0_i32_0 : i32, i32
  }
  func.func @transform_6(%arg0: i32) -> (i32, i32) {
    %c0_i32 = arith.constant 0 : i32
    %c0_i32_0 = arith.constant 0 : i32
    return %arg0, %c0_i32 : i32, i32
  }
}

</mosaic_0001>

<llo_original>
// kernel: cnn_classifier_forward.1
$region0: #{cnn_classifier_forward.1}
  #allocation0 [shape = 'u32[]', space=smem, size = 0x4, offset = 0x4, fixed_abs, tag = 'smem constant byte address 0x4 - core index']
  #allocation1 [shape = 'u32[144,128]{1,0:T(1,128)}', space=vmem, size = 0x12000, scoped, tag = 'internal scratch']
  %s0 = inlined_call_operand.vmem [shape: s32[8,10,1], index: 0, kind: input, shape index: {}]
  %s1 = inlined_call_operand.vmem [shape: f32[50,32], index: 1, kind: input, shape index: {}]
  %s2 = inlined_call_operand.vmem [shape: f32[128,12], index: 2, kind: input, shape index: {}]
  %s3 = inlined_call_operand.vmem [shape: f32[1,12], index: 3, kind: input, shape index: {}]
  %s4 = inlined_call_operand.vmem [shape: f32[12,128], index: 4, kind: input, shape index: {}]
  %s5 = inlined_call_operand.vmem [shape: f32[1,128], index: 5, kind: input, shape index: {}]
  %s6 = inlined_call_operand.vmem [shape: f32[8,128], index: 6, kind: output, shape index: {}]
  %s7 = sld [smem:[#allocation0]]
  $region34: #{cnn_classifier_forward.1} parent=0
    _
  %s9 = ssub.s32 1, %s7
  %s10 = scalar_select 0, %s9, %s7
  // Predicated region
  $region2: #{cnn_classifier_forward.1} parent=0 // pred_check
    _
  $region3: #{cnn_classifier_forward.1} parent=0 // pred_check_branch
    %12 = sbr.rel (0) target = $region5
  $region4: #{cnn_classifier_forward.1} parent=0 // pred_region
    _
  $region5: #{cnn_classifier_forward.1} parent=0 // pred_fallthru
    _
  // Predicated region
  $region6: #{cnn_classifier_forward.1} parent=0 // pred_check
    _
  $region7: #{cnn_classifier_forward.1} parent=0 // pred_check_branch
    %14 = sbr.rel (0) target = $region9
  $region8: #{cnn_classifier_forward.1} parent=0 // pred_region
    _
  $region9: #{cnn_classifier_forward.1} parent=0 // pred_fallthru
    _
  // Predicated region
  $region10: #{cnn_classifier_forward.1} parent=0 // pred_check
    _
  $region11: #{cnn_classifier_forward.1} parent=0 // pred_check_branch
    %16 = sbr.rel (0) target = $region13
  $region12: #{cnn_classifier_forward.1} parent=0 // pred_region
    _
  $region13: #{cnn_classifier_forward.1} parent=0 // pred_fallthru
    _
  // Predicated region
  $region14: #{cnn_classifier_forward.1} parent=0 // pred_check
    _
  $region15: #{cnn_classifier_forward.1} parent=0 // pred_check_branch
    %18 = sbr.rel (0) target = $region17
  $region16: #{cnn_classifier_forward.1} parent=0 // pred_region
    _
  $region17: #{cnn_classifier_forward.1} parent=0 // pred_fallthru
    _
  // Predicated region
  $region18: #{cnn_classifier_forward.1} parent=0 // pred_check
    _
  $region19: #{cnn_classifier_forward.1} parent=0 // pred_check_branch
    %20 = sbr.rel (0) target = $region21
  $region20: #{cnn_classifier_forward.1} parent=0 // pred_region
    _
  $region21: #{cnn_classifier_forward.1} parent=0 // pred_fallthru
    _
  // Predicated region
  $region22: #{cnn_classifier_forward.1} parent=0 // pred_check
    _
  $region23: #{cnn_classifier_forward.1} parent=0 // pred_check_branch
    %22 = sbr.rel (0) target = $region25
  $region24: #{cnn_classifier_forward.1} parent=0 // pred_region
    _
  $region25: #{cnn_classifier_forward.1} parent=0 // pred_fallthru
    _
  %v23 = vld [vmem:[%s1] sm:$0xff]
  %v24 = vld [vmem:[%s1 + $0x8] sm:$0xff]
  %v25 = vld [vmem:[%s1 + $0x10] sm:$0xff]
  %v26 = vld [vmem:[%s1 + $0x18] sm:$0xff]
  %v27 = vld [vmem:[%s1 + $0x20] sm:$0xff]
  %v28 = vld [vmem:[%s1 + $0x28] sm:$0xff]
  %v29 = vld [vmem:[%s1 + $0x30] sm:$0x3]
  %v30 = vld [vmem:[%s0] sm:$0xff]
  %v31 = vld [vmem:[%s0 + $0x8] sm:$0x3]
  %v32 = vld [vmem:[%s0 + $0x10] sm:$0xff]
  %v33 = vld [vmem:[%s0 + $0x18] sm:$0x3]
  %v34 = vld [vmem:[%s0 + $0x20] sm:$0xff]
  %v35 = vld [vmem:[%s0 + $0x28] sm:$0x3]
  %v36 = vld [vmem:[%s0 + $0x30] sm:$0xff]
  %v37 = vld [vmem:[%s0 + $0x38] sm:$0x3]
  %v38 = vld [vmem:[%s0 + $0x40] sm:$0xff]
  %v39 = vld [vmem:[%s0 + $0x48] sm:$0x3]
  %v40 = vld [vmem:[%s0 + $0x50] sm:$0xff]
  %v41 = vld [vmem:[%s0 + $0x58] sm:$0x3]
  %v42 = vld [vmem:[%s0 + $0x60] sm:$0xff]
  %v43 = vld [vmem:[%s0 + $0x68] sm:$0x3]
  %v44 = vld [vmem:[%s0 + $0x70] sm:$0xff]
  %v45 = vld [vmem:[%s0 + $0x78] sm:$0x3]
  %v46 = vlaneseq
  %v47 = vand.u32 %v46, 127
  %48 = vset.pattern.permute.xlu0 0
  %49 = vperm.xlu0 %48, %v30
  %v50 = vpop.permute.xlu0 %49
  %51 = vset.pattern.permute.xlu0 0
  %52 = vperm.xlu0 %51, %v31
  %v53 = vpop.permute.xlu0 %52
  %54 = vset.pattern.permute.xlu0 0
  %55 = vperm.xlu0 %54, %v32
  %v56 = vpop.permute.xlu0 %55
  %57 = vset.pattern.permute.xlu0 0
  %58 = vperm.xlu0 %57, %v33
  %v59 = vpop.permute.xlu0 %58
  %60 = vset.pattern.permute.xlu0 0
  %61 = vperm.xlu0 %60, %v34
  %v62 = vpop.permute.xlu0 %61
  %63 = vset.pattern.permute.xlu0 0
  %64 = vperm.xlu0 %63, %v35
  %v65 = vpop.permute.xlu0 %64
  %66 = vset.pattern.permute.xlu0 0
  %67 = vperm.xlu0 %66, %v36
  %v68 = vpop.permute.xlu0 %67
  %69 = vset.pattern.permute.xlu0 0
  %70 = vperm.xlu0 %69, %v37
  %v71 = vpop.permute.xlu0 %70
  %72 = vset.pattern.permute.xlu0 0
  %73 = vperm.xlu0 %72, %v38
  %v74 = vpop.permute.xlu0 %73
  %75 = vset.pattern.permute.xlu0 0
  %76 = vperm.xlu0 %75, %v39
  %v77 = vpop.permute.xlu0 %76
  %78 = vset.pattern.permute.xlu0 0
  %79 = vperm.xlu0 %78, %v40
  %v80 = vpop.permute.xlu0 %79
  %81 = vset.pattern.permute.xlu0 0
  %82 = vperm.xlu0 %81, %v41
  %v83 = vpop.permute.xlu0 %82
  %84 = vset.pattern.permute.xlu0 0
  %85 = vperm.xlu0 %84, %v42
  %v86 = vpop.permute.xlu0 %85
  %87 = vset.pattern.permute.xlu0 0
  %88 = vperm.xlu0 %87, %v43
  %v89 = vpop.permute.xlu0 %88
  %90 = vset.pattern.permute.xlu0 0
  %91 = vperm.xlu0 %90, %v44
  %v92 = vpop.permute.xlu0 %91
  %93 = vset.pattern.permute.xlu0 0
  %94 = vperm.xlu0 %93, %v45
  %v95 = vpop.permute.xlu0 %94
  %vm96 = vcmp.eq.s32.totalorder %v50, %v47
  %vm97 = vcmp.eq.s32.totalorder %v53, %v47
  %vm98 = vcmp.eq.s32.totalorder %v56, %v47
  %vm99 = vcmp.eq.s32.totalorder %v59, %v47
  %vm100 = vcmp.eq.s32.totalorder %v62, %v47
  %vm101 = vcmp.eq.s32.totalorder %v65, %v47
  %vm102 = vcmp.eq.s32.totalorder %v68, %v47
  %vm103 = vcmp.eq.s32.totalorder %v71, %v47
  %vm104 = vcmp.eq.s32.totalorder %v74, %v47
  %vm105 = vcmp.eq.s32.totalorder %v77, %v47
  %vm106 = vcmp.eq.s32.totalorder %v80, %v47
  %vm107 = vcmp.eq.s32.totalorder %v83, %v47
  %vm108 = vcmp.eq.s32.totalorder %v86, %v47
  %vm109 = vcmp.eq.s32.totalorder %v89, %v47
  %vm110 = vcmp.eq.s32.totalorder %v92, %v47
  %vm111 = vcmp.eq.s32.totalorder %v95, %v47
  %v112 = vsel %vm96, 1, 0
  %v113 = vsel %vm97, 1, 0
  %v114 = vsel %vm98, 1, 0
  %v115 = vsel %vm99, 1, 0
  %v116 = vsel %vm100, 1, 0
  %v117 = vsel %vm101, 1, 0
  %v118 = vsel %vm102, 1, 0
  %v119 = vsel %vm103, 1, 0
  %v120 = vsel %vm104, 1, 0
  %v121 = vsel %vm105, 1, 0
  %v122 = vsel %vm106, 1, 0
  %v123 = vsel %vm107, 1, 0
  %v124 = vsel %vm108, 1, 0
  %v125 = vsel %vm109, 1, 0
  %v126 = vsel %vm110, 1, 0
  %v127 = vsel %vm111, 1, 0
  %v128 = vcvt.s32.f32 %v112
  %v129 = vcvt.s32.f32 %v113
  %v130 = vcvt.s32.f32 %v114
  %v131 = vcvt.s32.f32 %v115
  %v132 = vcvt.s32.f32 %v116
  %v133 = vcvt.s32.f32 %v117
  %v134 = vcvt.s32.f32 %v118
  %v135 = vcvt.s32.f32 %v119
  %v136 = vcvt.s32.f32 %v120
  %v137 = vcvt.s32.f32 %v121
  %v138 = vcvt.s32.f32 %v122
  %v139 = vcvt.s32.f32 %v123
  %v140 = vcvt.s32.f32 %v124
  %v141 = vcvt.s32.f32 %v125
  %v142 = vcvt.s32.f32 %v126
  %v143 = vcvt.s32.f32 %v127
  %v160 = vcombine.high %v128, %v128
  %v162 = vunpack.c.l.s4 1983009808
  %v163 = vunpack.c.0.s8 %v162
  %v164 = vlaneseq
  %v165 = vshrl.u32 %v164, 7
  %v166 = vsub.s32 %v163, %v165
  %v167 = vrot.slane %v128, %v166
  %v169 = vunpack.c.l.s4 1983009808
  %v170 = vunpack.c.0.s8 %v169
  %v171 = vlaneseq
  %v172 = vshrl.u32 %v171, 7
  %v173 = vsub.s32 %v170, %v172
  %v174 = vrot.slane %v160, %v173
  %v175 = vcombine.high %v167, %v167
  %v176 = vcombine.high %v174, %v174
  %v178 = vunpack.c.l.s4 1983009808
  %v179 = vunpack.c.0.s8 %v178
  %v180 = vlaneseq
  %v181 = vshrl.u32 %v180, 7
  %v182 = vsub.s32 %v179, %v181
  %v183 = vrot.slane %v129, %v182
  %v184 = vcombine.high %v130, %v130
  %v186 = vunpack.c.l.s4 1983009808
  %v187 = vunpack.c.0.s8 %v186
  %v188 = vlaneseq
  %v189 = vshrl.u32 %v188, 7
  %v190 = vsub.s32 %v187, %v189
  %v191 = vrot.slane %v130, %v190
  %v193 = vunpack.c.l.s4 1983009808
  %v194 = vunpack.c.0.s8 %v193
  %v195 = vlaneseq
  %v196 = vshrl.u32 %v195, 7
  %v197 = vsub.s32 %v194, %v196
  %v198 = vrot.slane %v184, %v197
  %v199 = vcombine.high %v191, %v191
  %v200 = vcombine.high %v198, %v198
  %v202 = vunpack.c.l.s4 1983009808
  %v203 = vunpack.c.0.s8 %v202
  %v204 = vlaneseq
  %v205 = vshrl.u32 %v204, 7
  %v206 = vsub.s32 %v203, %v205
  %v207 = vrot.slane %v131, %v206
  %v208 = vcombine.high %v132, %v132
  %v210 = vunpack.c.l.s4 1983009808
  %v211 = vunpack.c.0.s8 %v210
  %v212 = vlaneseq
  %v213 = vshrl.u32 %v212, 7
  %v214 = vsub.s32 %v211, %v213
  %v215 = vrot.slane %v132, %v214
  %v217 = vunpack.c.l.s4 1983009808
  %v218 = vunpack.c.0.s8 %v217
  %v219 = vlaneseq
  %v220 = vshrl.u32 %v219, 7
  %v221 = vsub.s32 %v218, %v220
  %v222 = vrot.slane %v208, %v221
  %v223 = vcombine.high %v215, %v215
  %v224 = vcombine.high %v222, %v222
  %v226 = vunpack.c.l.s4 1983009808
  %v227 = vunpack.c.0.s8 %v226
  %v228 = vlaneseq
  %v229 = vshrl.u32 %v228, 7
  %v230 = vsub.s32 %v227, %v229
  %v231 = vrot.slane %v133, %v230
  %v232 = vcombine.high %v134, %v134
  %v234 = vunpack.c.l.s4 1983009808
  %v235 = vunpack.c.0.s8 %v234
  %v236 = vlaneseq
  %v237 = vshrl.u32 %v236, 7
  %v238 = vsub.s32 %v235, %v237
  %v239 = vrot.slane %v134, %v238
  %v241 = vunpack.c.l.s4 1983009808
  %v242 = vunpack.c.0.s8 %v241
  %v243 = vlaneseq
  %v244 = vshrl.u32 %v243, 7
  %v245 = vsub.s32 %v242, %v244
  %v246 = vrot.slane %v232, %v245
  %v247 = vcombine.high %v239, %v239
  %v248 = vcombine.high %v246, %v246
  %v250 = vunpack.c.l.s4 1983009808
  %v251 = vunpack.c.0.s8 %v250
  %v252 = vlaneseq
  %v253 = vshrl.u32 %v252, 7
  %v254 = vsub.s32 %v251, %v253
  %v255 = vrot.slane %v135, %v254
  %v256 = vcombine.high %v136, %v136
  %v258 = vunpack.c.l.s4 1983009808
  %v259 = vunpack.c.0.s8 %v258
  %v260 = vlaneseq
  %v261 = vshrl.u32 %v260, 7
  %v262 = vsub.s32 %v259, %v261
  %v263 = vrot.slane %v136, %v262
  %v265 = vunpack.c.l.s4 1983009808
  %v266 = vunpack.c.0.s8 %v265
  %v267 = vlaneseq
  %v268 = vshrl.u32 %v267, 7
  %v269 = vsub.s32 %v266, %v268
  %v270 = vrot.slane %v256, %v269
  %v271 = vcombine.high %v263, %v263
  %v272 = vcombine.high %v270, %v270
  %v274 = vunpack.c.l.s4 1983009808
  %v275 = vunpack.c.0.s8 %v274
  %v276 = vlaneseq
  %v277 = vshrl.u32 %v276, 7
  %v278 = vsub.s32 %v275, %v277
  %v279 = vrot.slane %v137, %v278
  %v280 = vcombine.high %v138, %v138
  %v282 = vunpack.c.l.s4 1983009808
  %v283 = vunpack.c.0.s8 %v282
  %v284 = vlaneseq
  %v285 = vshrl.u32 %v284, 7
  %v286 = vsub.s32 %v283, %v285
  %v287 = vrot.slane %v138, %v286
  %v289 = vunpack.c.l.s4 1983009808
  %v290 = vunpack.c.0.s8 %v289
  %v291 = vlaneseq
  %v292 = vshrl.u32 %v291, 7
  %v293 = vsub.s32 %v290, %v292
  %v294 = vrot.slane %v280, %v293
  %v295 = vcombine.high %v287, %v287
  %v296 = vcombine.high %v294, %v294
  %v298 = vunpack.c.l.s4 1983009808
  %v299 = vunpack.c.0.s8 %v298
  %v300 = vlaneseq
  %v301 = vshrl.u32 %v300, 7
  %v302 = vsub.s32 %v299, %v301
  %v303 = vrot.slane %v139, %v302
  %v304 = vcombine.high %v140, %v140
  %v306 = vunpack.c.l.s4 1983009808
  %v307 = vunpack.c.0.s8 %v306
  %v308 = vlaneseq
  %v309 = vshrl.u32 %v308, 7
  %v310 = vsub.s32 %v307, %v309
  %v311 = vrot.slane %v140, %v310
  %v313 = vunpack.c.l.s4 1983009808
  %v314 = vunpack.c.0.s8 %v313
  %v315 = vlaneseq
  %v316 = vshrl.u32 %v315, 7
  %v317 = vsub.s32 %v314, %v316
  %v318 = vrot.slane %v304, %v317
  %v319 = vcombine.high %v311, %v311
  %v320 = vcombine.high %v318, %v318
  %v322 = vunpack.c.l.s4 1983009808
  %v323 = vunpack.c.0.s8 %v322
  %v324 = vlaneseq
  %v325 = vshrl.u32 %v324, 7
  %v326 = vsub.s32 %v323, %v325
  %v327 = vrot.slane %v141, %v326
  %v328 = vcombine.high %v142, %v142
  %v330 = vunpack.c.l.s4 1983009808
  %v331 = vunpack.c.0.s8 %v330
  %v332 = vlaneseq
  %v333 = vshrl.u32 %v332, 7
  %v334 = vsub.s32 %v331, %v333
  %v335 = vrot.slane %v142, %v334
  %v337 = vunpack.c.l.s4 1983009808
  %v338 = vunpack.c.0.s8 %v337
  %v339 = vlaneseq
  %v340 = vshrl.u32 %v339, 7
  %v341 = vsub.s32 %v338, %v340
  %v342 = vrot.slane %v328, %v341
  %v343 = vcombine.high %v335, %v335
  %v344 = vcombine.high %v342, %v342
  %v346 = vunpack.c.l.s4 1983009808
  %v347 = vunpack.c.0.s8 %v346
  %v348 = vlaneseq
  %v349 = vshrl.u32 %v348, 7
  %v350 = vsub.s32 %v347, %v349
  %v351 = vrot.slane %v143, %v350
  %v352 = vcombine.low %v167, %v175
  %v353 = vcombine.low %v174, %v176
  %v355 = vunpack.c.l.s4 1983009808
  %v356 = vunpack.c.0.s8 %v355
  %v357 = vlaneseq
  %v358 = vshrl.u32 %v357, 7
  %v359 = vsub.s32 %v356, %v358
  %v360 = vrot.slane %v352, %v359
  %v362 = vunpack.c.l.s4 1983009808
  %v363 = vunpack.c.0.s8 %v362
  %v364 = vlaneseq
  %v365 = vshrl.u32 %v364, 7
  %v366 = vsub.s32 %v363, %v365
  %v367 = vrot.slane %v353, %v366
  %v368 = vcombine.low %v360, %v367
  %v369 = vcombine.low %v183, %v191
  %v370 = vcombine.low %v199, %v198
  %v372 = vunpack.c.l.s4 1983009808
  %v373 = vunpack.c.0.s8 %v372
  %v374 = vlaneseq
  %v375 = vshrl.u32 %v374, 7
  %v376 = vsub.s32 %v373, %v375
  %v377 = vrot.slane %v369, %v376
  %v379 = vunpack.c.l.s4 1983009808
  %v380 = vunpack.c.0.s8 %v379
  %v381 = vlaneseq
  %v382 = vshrl.u32 %v381, 7
  %v383 = vsub.s32 %v380, %v382
  %v384 = vrot.slane %v370, %v383
  %v385 = vcombine.low %v377, %v384
  %v386 = vcombine.low %v200, %v207
  %v387 = vcombine.low %v215, %v223
  %v389 = vunpack.c.l.s4 1983009808
  %v390 = vunpack.c.0.s8 %v389
  %v391 = vlaneseq
  %v392 = vshrl.u32 %v391, 7
  %v393 = vsub.s32 %v390, %v392
  %v394 = vrot.slane %v386, %v393
  %v396 = vunpack.c.l.s4 1983009808
  %v397 = vunpack.c.0.s8 %v396
  %v398 = vlaneseq
  %v399 = vshrl.u32 %v398, 7
  %v400 = vsub.s32 %v397, %v399
  %v401 = vrot.slane %v387, %v400
  %v402 = vcombine.low %v394, %v401
  %v403 = vcombine.low %v222, %v224
  %v404 = vcombine.low %v231, %v239
  %v406 = vunpack.c.l.s4 1983009808
  %v407 = vunpack.c.0.s8 %v406
  %v408 = vlaneseq
  %v409 = vshrl.u32 %v408, 7
  %v410 = vsub.s32 %v407, %v409
  %v411 = vrot.slane %v403, %v410
  %v413 = vunpack.c.l.s4 1983009808
  %v414 = vunpack.c.0.s8 %v413
  %v415 = vlaneseq
  %v416 = vshrl.u32 %v415, 7
  %v417 = vsub.s32 %v414, %v416
  %v418 = vrot.slane %v404, %v417
  %v419 = vcombine.low %v411, %v418
  %v420 = vcombine.low %v247, %v246
  %v421 = vcombine.low %v248, %v255
  %v423 = vunpack.c.l.s4 1983009808
  %v424 = vunpack.c.0.s8 %v423
  %v425 = vlaneseq
  %v426 = vshrl.u32 %v425, 7
  %v427 = vsub.s32 %v424, %v426
  %v428 = vrot.slane %v420, %v427
  %v430 = vunpack.c.l.s4 1983009808
  %v431 = vunpack.c.0.s8 %v430
  %v432 = vlaneseq
  %v433 = vshrl.u32 %v432, 7
  %v434 = vsub.s32 %v431, %v433
  %v435 = vrot.slane %v421, %v434
  %v436 = vcombine.low %v428, %v435
  %v437 = vcombine.low %v263, %v271
  %v438 = vcombine.low %v270, %v272
  %v440 = vunpack.c.l.s4 1983009808
  %v441 = vunpack.c.0.s8 %v440
  %v442 = vlaneseq
  %v443 = vshrl.u32 %v442, 7
  %v444 = vsub.s32 %v441, %v443
  %v445 = vrot.slane %v437, %v444
  %v447 = vunpack.c.l.s4 1983009808
  %v448 = vunpack.c.0.s8 %v447
  %v449 = vlaneseq
  %v450 = vshrl.u32 %v449, 7
  %v451 = vsub.s32 %v448, %v450
  %v452 = vrot.slane %v438, %v451
  %v453 = vcombine.low %v445, %v452
  %v454 = vcombine.low %v279, %v287
  %v455 = vcombine.low %v295, %v294
  %v457 = vunpack.c.l.s4 1983009808
  %v458 = vunpack.c.0.s8 %v457
  %v459 = vlaneseq
  %v460 = vshrl.u32 %v459, 7
  %v461 = vsub.s32 %v458, %v460
  %v462 = vrot.slane %v454, %v461
  %v464 = vunpack.c.l.s4 1983009808
  %v465 = vunpack.c.0.s8 %v464
  %v466 = vlaneseq
  %v467 = vshrl.u32 %v466, 7
  %v468 = vsub.s32 %v465, %v467
  %v469 = vrot.slane %v455, %v468
  %v470 = vcombine.low %v462, %v469
  %v471 = vcombine.low %v296, %v303
  %v472 = vcombine.low %v311, %v319
  %v474 = vunpack.c.l.s4 1983009808
  %v475 = vunpack.c.0.s8 %v474
  %v476 = vlaneseq
  %v477 = vshrl.u32 %v476, 7
  %v478 = vsub.s32 %v475, %v477
  %v479 = vrot.slane %v471, %v478
  %v481 = vunpack.c.l.s4 1983009808
  %v482 = vunpack.c.0.s8 %v481
  %v483 = vlaneseq
  %v484 = vshrl.u32 %v483, 7
  %v485 = vsub.s32 %v482, %v484
  %v486 = vrot.slane %v472, %v485
  %v487 = vcombine.low %v479, %v486
  %v488 = vcombine.low %v318, %v320
  %v489 = vcombine.low %v327, %v335
  %v491 = vunpack.c.l.s4 1983009808
  %v492 = vunpack.c.0.s8 %v491
  %v493 = vlaneseq
  %v494 = vshrl.u32 %v493, 7
  %v495 = vsub.s32 %v492, %v494
  %v496 = vrot.slane %v488, %v495
  %v498 = vunpack.c.l.s4 1983009808
  %v499 = vunpack.c.0.s8 %v498
  %v500 = vlaneseq
  %v501 = vshrl.u32 %v500, 7
  %v502 = vsub.s32 %v499, %v501
  %v503 = vrot.slane %v489, %v502
  %v504 = vcombine.low %v496, %v503
  %v505 = vcombine.low %v343, %v342
  %v506 = vcombine.low %v344, %v351
  %v508 = vunpack.c.l.s4 1983009808
  %v509 = vunpack.c.0.s8 %v508
  %v510 = vlaneseq
  %v511 = vshrl.u32 %v510, 7
  %v512 = vsub.s32 %v509, %v511
  %v513 = vrot.slane %v505, %v512
  %v515 = vunpack.c.l.s4 1983009808
  %v516 = vunpack.c.0.s8 %v515
  %v517 = vlaneseq
  %v518 = vshrl.u32 %v517, 7
  %v519 = vsub.s32 %v516, %v518
  %v520 = vrot.slane %v506, %v519
  %v521 = vcombine.low %v513, %v520
  %vm522 = vcmask 408576
  %v523 = vsel %vm522, %v368, 0
  %v525 = vsel %vm522, %v385, 0
  %v527 = vsel %vm522, %v402, 0
  %v529 = vsel %vm522, %v419, 0
  %v531 = vsel %vm522, %v436, 0
  %v533 = vsel %vm522, %v453, 0
  %v535 = vsel %vm522, %v470, 0
  %v537 = vsel %vm522, %v487, 0
  %v539 = vsel %vm522, %v504, 0
  %v541 = vsel %vm522, %v521, 0
  %vm543 = vcmask 1041408
  %v545 = vsel %vm543, %v29, 0
  %547 = vmatprep.subr.mxu0 0.0
  %548 = vmatpush1.msra.mxu0 0.0
  %549 = vmatprep.subr.mxu0 0.0
  %550 = vmatpush1.msra.mxu0 0.0
  %551 = vmatprep.subr.mxu0 0.0
  %552 = vmatpush1.msra.mxu0 0.0
  %553 = vmatprep.subr.mxu0 0.0
  %554 = vmatpush1.msra.mxu0 0.0
  %555 = vmatprep.subr.mxu0 0.0
  %556 = vmatpush1.msra.mxu0 0.0
  %557 = vmatprep.subr.mxu0 0.0
  %558 = vmatpush1.msra.mxu0 0.0
  %559 = vmatprep.subr.mxu0 0.0
  %560 = vmatpush1.msra.mxu0 0.0
  %561 = vmatprep.subr.mxu0 0.0
  %562 = vmatpush1.msra.mxu0 0.0
  %563 = vmatprep.subr.mxu0 0.0
  %564 = vmatpush1.msra.mxu0 0.0
  %565 = vmatprep.subr.mxu0 0.0
  %566 = vmatpush1.msra.mxu0 %v545
  %567 = vmatprep.subr.mxu0 0.0
  %568 = vmatpush1.msra.mxu0 %v28
  %569 = vmatprep.subr.mxu0 0.0
  %570 = vmatpush1.msra.mxu0 %v27
  %571 = vmatprep.subr.mxu0 0.0
  %572 = vmatpush1.msra.mxu0 %v26
  %573 = vmatprep.subr.mxu0 0.0
  %574 = vmatpush1.msra.mxu0 %v25
  %575 = vmatprep.subr.mxu0 0.0
  %576 = vmatpush1.msra.mxu0 %v24
  %577 = vmatprep.subr.mxu0 0.0
  %578 = vmatpush1.msra.mxu0 %v23
  %579 = vmatprep.subr.mxu0 0.0
  %580 = vmatpush2.msra.mxu0 0.0
  %581 = vmatprep.subr.mxu0 0.0
  %582 = vmatpush2.msra.mxu0 0.0
  %583 = vmatprep.subr.mxu0 0.0
  %584 = vmatpush2.msra.mxu0 0.0
  %585 = vmatprep.subr.mxu0 0.0
  %586 = vmatpush2.msra.mxu0 0.0
  %587 = vmatprep.subr.mxu0 0.0
  %588 = vmatpush2.msra.mxu0 0.0
  %589 = vmatprep.subr.mxu0 0.0
  %590 = vmatpush2.msra.mxu0 0.0
  %591 = vmatprep.subr.mxu0 0.0
  %592 = vmatpush2.msra.mxu0 0.0
  %593 = vmatprep.subr.mxu0 0.0
  %594 = vmatpush2.msra.mxu0 0.0
  %595 = vmatprep.subr.mxu0 0.0
  %596 = vmatpush2.msra.mxu0 0.0
  %597 = vmatprep.subr.mxu0 0.0
  %598 = vmatpush2.msra.mxu0 0.0
  %599 = vmatprep.subr.mxu0 0.0
  %600 = vmatpush2.msra.mxu0 0.0
  %601 = vmatprep.subr.mxu0 0.0
  %602 = vmatpush2.msra.mxu0 0.0
  %603 = vmatprep.subr.mxu0 0.0
  %604 = vmatpush2.msra.mxu0 0.0
  %605 = vmatprep.subr.mxu0 0.0
  %606 = vmatpush2.msra.mxu0 0.0
  %607 = vmatprep.subr.mxu0 0.0
  %608 = vmatpush2.msra.mxu0 0.0
  %609 = vmatprep.subr.mxu0 0.0
  %610 = vmatpush2.msra.mxu0 0.0
  %611 = vmatprep.mubr.f32.mxu0 0.0
  %612 = vmatmul.mubr.f32.gmra.mxu0 %v523
  %v613 = vpop.f32.mrf.mxu0
  %v614 = vadd.f32 0.0, %v613
  %v615 = vpop.f32.mrf.mxu0
  %616 = vmatprep.mubr.f32.mxu0 0.0
  %617 = vmatmul.mubr.f32.gmra.mxu0 %v525
  %v618 = vpop.f32.mrf.mxu0
  %v619 = vadd.f32 0.0, %v618
  %v620 = vpop.f32.mrf.mxu0
  %621 = vmatprep.mubr.f32.mxu0 0.0
  %622 = vmatmul.mubr.f32.gmra.mxu0 %v527
  %v623 = vpop.f32.mrf.mxu0
  %v624 = vadd.f32 0.0, %v623
  %v625 = vpop.f32.mrf.mxu0
  %626 = vmatprep.mubr.f32.mxu0 0.0
  %627 = vmatmul.mubr.f32.gmra.mxu0 %v529
  %v628 = vpop.f32.mrf.mxu0
  %v629 = vadd.f32 0.0, %v628
  %v630 = vpop.f32.mrf.mxu0
  %631 = vmatprep.mubr.f32.mxu0 0.0
  %632 = vmatmul.mubr.f32.gmra.mxu0 %v531
  %v633 = vpop.f32.mrf.mxu0
  %v634 = vadd.f32 0.0, %v633
  %v635 = vpop.f32.mrf.mxu0
  %636 = vmatprep.mubr.f32.mxu0 0.0
  %637 = vmatmul.mubr.f32.gmra.mxu0 %v533
  %v638 = vpop.f32.mrf.mxu0
  %v639 = vadd.f32 0.0, %v638
  %v640 = vpop.f32.mrf.mxu0
  %641 = vmatprep.mubr.f32.mxu0 0.0
  %642 = vmatmul.mubr.f32.gmra.mxu0 %v535
  %v643 = vpop.f32.mrf.mxu0
  %v644 = vadd.f32 0.0, %v643
  %v645 = vpop.f32.mrf.mxu0
  %646 = vmatprep.mubr.f32.mxu0 0.0
  %647 = vmatmul.mubr.f32.gmra.mxu0 %v537
  %v648 = vpop.f32.mrf.mxu0
  %v649 = vadd.f32 0.0, %v648
  %v650 = vpop.f32.mrf.mxu0
  %651 = vmatprep.mubr.f32.mxu0 0.0
  %652 = vmatmul.mubr.f32.gmra.mxu0 %v539
  %v653 = vpop.f32.mrf.mxu0
  %v654 = vadd.f32 0.0, %v653
  %v655 = vpop.f32.mrf.mxu0
  %656 = vmatprep.mubr.f32.mxu0 0.0
  %657 = vmatmul.mubr.f32.gmra.mxu0 %v541
  %v658 = vpop.f32.mrf.mxu0
  %v659 = vadd.f32 0.0, %v658
  %v660 = vpop.f32.mrf.mxu0
  %661 = vdwg.mxu0
  %v672 = vcombine.high %v614, %v614
  %v674 = vunpack.c.l.s4 1983009808
  %v675 = vunpack.c.0.s8 %v674
  %v676 = vlaneseq
  %v677 = vshrl.u32 %v676, 7
  %v678 = vsub.s32 %v675, %v677
  %v679 = vrot.slane %v614, %v678
  %v681 = vunpack.c.l.s4 1983009808
  %v682 = vunpack.c.0.s8 %v681
  %v683 = vlaneseq
  %v684 = vshrl.u32 %v683, 7
  %v685 = vsub.s32 %v682, %v684
  %v686 = vrot.slane %v672, %v685
  %v687 = vcombine.high %v679, %v679
  %v688 = vcombine.high %v686, %v686
  %v689 = vcombine.high %v619, %v619
  %v691 = vunpack.c.l.s4 1983009808
  %v692 = vunpack.c.0.s8 %v691
  %v693 = vlaneseq
  %v694 = vshrl.u32 %v693, 7
  %v695 = vsub.s32 %v692, %v694
  %v696 = vrot.slane %v619, %v695
  %v698 = vunpack.c.l.s4 1983009808
  %v699 = vunpack.c.0.s8 %v698
  %v700 = vlaneseq
  %v701 = vshrl.u32 %v700, 7
  %v702 = vsub.s32 %v699, %v701
  %v703 = vrot.slane %v689, %v702
  %v704 = vcombine.high %v696, %v696
  %v705 = vcombine.high %v703, %v703
  %v706 = vcombine.high %v624, %v624
  %v708 = vunpack.c.l.s4 1983009808
  %v709 = vunpack.c.0.s8 %v708
  %v710 = vlaneseq
  %v711 = vshrl.u32 %v710, 7
  %v712 = vsub.s32 %v709, %v711
  %v713 = vrot.slane %v624, %v712
  %v715 = vunpack.c.l.s4 1983009808
  %v716 = vunpack.c.0.s8 %v715
  %v717 = vlaneseq
  %v718 = vshrl.u32 %v717, 7
  %v719 = vsub.s32 %v716, %v718
  %v720 = vrot.slane %v706, %v719
  %v721 = vcombine.high %v713, %v713
  %v722 = vcombine.high %v720, %v720
  %v723 = vcombine.high %v629, %v629
  %v725 = vunpack.c.l.s4 1983009808
  %v726 = vunpack.c.0.s8 %v725
  %v727 = vlaneseq
  %v728 = vshrl.u32 %v727, 7
  %v729 = vsub.s32 %v726, %v728
  %v730 = vrot.slane %v629, %v729
  %v732 = vunpack.c.l.s4 1983009808
  %v733 = vunpack.c.0.s8 %v732
  %v734 = vlaneseq
  %v735 = vshrl.u32 %v734, 7
  %v736 = vsub.s32 %v733, %v735
  %v737 = vrot.slane %v723, %v736
  %v738 = vcombine.high %v730, %v730
  %v739 = vcombine.high %v737, %v737
  %v740 = vcombine.high %v634, %v634
  %v742 = vunpack.c.l.s4 1983009808
  %v743 = vunpack.c.0.s8 %v742
  %v744 = vlaneseq
  %v745 = vshrl.u32 %v744, 7
  %v746 = vsub.s32 %v743, %v745
  %v747 = vrot.slane %v634, %v746
  %v749 = vunpack.c.l.s4 1983009808
  %v750 = vunpack.c.0.s8 %v749
  %v751 = vlaneseq
  %v752 = vshrl.u32 %v751, 7
  %v753 = vsub.s32 %v750, %v752
  %v754 = vrot.slane %v740, %v753
  %v755 = vcombine.high %v747, %v747
  %v756 = vcombine.high %v754, %v754
  %v757 = vcombine.high %v639, %v639
  %v759 = vunpack.c.l.s4 1983009808
  %v760 = vunpack.c.0.s8 %v759
  %v761 = vlaneseq
  %v762 = vshrl.u32 %v761, 7
  %v763 = vsub.s32 %v760, %v762
  %v764 = vrot.slane %v639, %v763
  %v766 = vunpack.c.l.s4 1983009808
  %v767 = vunpack.c.0.s8 %v766
  %v768 = vlaneseq
  %v769 = vshrl.u32 %v768, 7
  %v770 = vsub.s32 %v767, %v769
  %v771 = vrot.slane %v757, %v770
  %v772 = vcombine.high %v764, %v764
  %v773 = vcombine.high %v771, %v771
  %v774 = vcombine.high %v644, %v644
  %v776 = vunpack.c.l.s4 1983009808
  %v777 = vunpack.c.0.s8 %v776
  %v778 = vlaneseq
  %v779 = vshrl.u32 %v778, 7
  %v780 = vsub.s32 %v777, %v779
  %v781 = vrot.slane %v644, %v780
  %v783 = vunpack.c.l.s4 1983009808
  %v784 = vunpack.c.0.s8 %v783
  %v785 = vlaneseq
  %v786 = vshrl.u32 %v785, 7
  %v787 = vsub.s32 %v784, %v786
  %v788 = vrot.slane %v774, %v787
  %v789 = vcombine.high %v781, %v781
  %v790 = vcombine.high %v788, %v788
  %v791 = vcombine.high %v649, %v649
  %v793 = vunpack.c.l.s4 1983009808
  %v794 = vunpack.c.0.s8 %v793
  %v795 = vlaneseq
  %v796 = vshrl.u32 %v795, 7
  %v797 = vsub.s32 %v794, %v796
  %v798 = vrot.slane %v649, %v797
  %v800 = vunpack.c.l.s4 1983009808
  %v801 = vunpack.c.0.s8 %v800
  %v802 = vlaneseq
  %v803 = vshrl.u32 %v802, 7
  %v804 = vsub.s32 %v801, %v803
  %v805 = vrot.slane %v791, %v804
  %v806 = vcombine.high %v798, %v798
  %v807 = vcombine.high %v805, %v805
  %v808 = vcombine.high %v654, %v654
  %v810 = vunpack.c.l.s4 1983009808
  %v811 = vunpack.c.0.s8 %v810
  %v812 = vlaneseq
  %v813 = vshrl.u32 %v812, 7
  %v814 = vsub.s32 %v811, %v813
  %v815 = vrot.slane %v654, %v814
  %v817 = vunpack.c.l.s4 1983009808
  %v818 = vunpack.c.0.s8 %v817
  %v819 = vlaneseq
  %v820 = vshrl.u32 %v819, 7
  %v821 = vsub.s32 %v818, %v820
  %v822 = vrot.slane %v808, %v821
  %v823 = vcombine.high %v815, %v815
  %v824 = vcombine.high %v822, %v822
  %v825 = vcombine.high %v659, %v659
  %v827 = vunpack.c.l.s4 1983009808
  %v828 = vunpack.c.0.s8 %v827
  %v829 = vlaneseq
  %v830 = vshrl.u32 %v829, 7
  %v831 = vsub.s32 %v828, %v830
  %v832 = vrot.slane %v659, %v831
  %v834 = vunpack.c.l.s4 1983009808
  %v835 = vunpack.c.0.s8 %v834
  %v836 = vlaneseq
  %v837 = vshrl.u32 %v836, 7
  %v838 = vsub.s32 %v835, %v837
  %v839 = vrot.slane %v825, %v838
  %v840 = vcombine.high %v832, %v832
  %v841 = vcombine.high %v839, %v839
  %v842 = vcombine.low %v679, %v687
  %v843 = vcombine.low %v686, %v688
  %v845 = vunpack.c.l.s4 1983009808
  %v846 = vunpack.c.0.s8 %v845
  %v847 = vlaneseq
  %v848 = vshrl.u32 %v847, 7
  %v849 = vsub.s32 %v846, %v848
  %v850 = vrot.slane %v842, %v849
  %v852 = vunpack.c.l.s4 1983009808
  %v853 = vunpack.c.0.s8 %v852
  %v854 = vlaneseq
  %v855 = vshrl.u32 %v854, 7
  %v856 = vsub.s32 %v853, %v855
  %v857 = vrot.slane %v843, %v856
  %v858 = vcombine.low %v850, %v857
  %v859 = vcombine.low %v704, %v703
  %v860 = vcombine.low %v705, %v713
  %v862 = vunpack.c.l.s4 1983009808
  %v863 = vunpack.c.0.s8 %v862
  %v864 = vlaneseq
  %v865 = vshrl.u32 %v864, 7
  %v866 = vsub.s32 %v863, %v865
  %v867 = vrot.slane %v859, %v866
  %v869 = vunpack.c.l.s4 1983009808
  %v870 = vunpack.c.0.s8 %v869
  %v871 = vlaneseq
  %v872 = vshrl.u32 %v871, 7
  %v873 = vsub.s32 %v870, %v872
  %v874 = vrot.slane %v860, %v873
  %v875 = vcombine.low %v867, %v874
  %v876 = vcombine.low %v720, %v722
  %v877 = vcombine.low %v730, %v738
  %v879 = vunpack.c.l.s4 1983009808
  %v880 = vunpack.c.0.s8 %v879
  %v881 = vlaneseq
  %v882 = vshrl.u32 %v881, 7
  %v883 = vsub.s32 %v880, %v882
  %v884 = vrot.slane %v876, %v883
  %v886 = vunpack.c.l.s4 1983009808
  %v887 = vunpack.c.0.s8 %v886
  %v888 = vlaneseq
  %v889 = vshrl.u32 %v888, 7
  %v890 = vsub.s32 %v887, %v889
  %v891 = vrot.slane %v877, %v890
  %v892 = vcombine.low %v884, %v891
  %v893 = vcombine.low %v739, %v747
  %v894 = vcombine.low %v755, %v754
  %v896 = vunpack.c.l.s4 1983009808
  %v897 = vunpack.c.0.s8 %v896
  %v898 = vlaneseq
  %v899 = vshrl.u32 %v898, 7
  %v900 = vsub.s32 %v897, %v899
  %v901 = vrot.slane %v893, %v900
  %v903 = vunpack.c.l.s4 1983009808
  %v904 = vunpack.c.0.s8 %v903
  %v905 = vlaneseq
  %v906 = vshrl.u32 %v905, 7
  %v907 = vsub.s32 %v904, %v906
  %v908 = vrot.slane %v894, %v907
  %v909 = vcombine.low %v901, %v908
  %v910 = vcombine.low %v764, %v772
  %v911 = vcombine.low %v771, %v773
  %v913 = vunpack.c.l.s4 1983009808
  %v914 = vunpack.c.0.s8 %v913
  %v915 = vlaneseq
  %v916 = vshrl.u32 %v915, 7
  %v917 = vsub.s32 %v914, %v916
  %v918 = vrot.slane %v910, %v917
  %v920 = vunpack.c.l.s4 1983009808
  %v921 = vunpack.c.0.s8 %v920
  %v922 = vlaneseq
  %v923 = vshrl.u32 %v922, 7
  %v924 = vsub.s32 %v921, %v923
  %v925 = vrot.slane %v911, %v924
  %v926 = vcombine.low %v918, %v925
  %v927 = vcombine.low %v789, %v788
  %v928 = vcombine.low %v790, %v798
  %v930 = vunpack.c.l.s4 1983009808
  %v931 = vunpack.c.0.s8 %v930
  %v932 = vlaneseq
  %v933 = vshrl.u32 %v932, 7
  %v934 = vsub.s32 %v931, %v933
  %v935 = vrot.slane %v927, %v934
  %v937 = vunpack.c.l.s4 1983009808
  %v938 = vunpack.c.0.s8 %v937
  %v939 = vlaneseq
  %v940 = vshrl.u32 %v939, 7
  %v941 = vsub.s32 %v938, %v940
  %v942 = vrot.slane %v928, %v941
  %v943 = vcombine.low %v935, %v942
  %v944 = vcombine.low %v805, %v807
  %v945 = vcombine.low %v815, %v823
  %v947 = vunpack.c.l.s4 1983009808
  %v948 = vunpack.c.0.s8 %v947
  %v949 = vlaneseq
  %v950 = vshrl.u32 %v949, 7
  %v951 = vsub.s32 %v948, %v950
  %v952 = vrot.slane %v944, %v951
  %v954 = vunpack.c.l.s4 1983009808
  %v955 = vunpack.c.0.s8 %v954
  %v956 = vlaneseq
  %v957 = vshrl.u32 %v956, 7
  %v958 = vsub.s32 %v955, %v957
  %v959 = vrot.slane %v945, %v958
  %v960 = vcombine.low %v952, %v959
  %v961 = vcombine.low %v824, %v832
  %v962 = vcombine.low %v840, %v839
  %v964 = vunpack.c.l.s4 1983009808
  %v965 = vunpack.c.0.s8 %v964
  %v966 = vlaneseq
  %v967 = vshrl.u32 %v966, 7
  %v968 = vsub.s32 %v965, %v967
  %v969 = vrot.slane %v961, %v968
  %v971 = vunpack.c.l.s4 1983009808
  %v972 = vunpack.c.0.s8 %v971
  %v973 = vlaneseq
  %v974 = vshrl.u32 %v973, 7
  %v975 = vsub.s32 %v972, %v974
  %v976 = vrot.slane %v962, %v975
  %v977 = vcombine.low %v969, %v976
  %v986 = vrot.slane %v858, 1
  %v987 = vrot.slane %v875, 1
  %v988 = vrot.slane %v892, 1
  %v989 = vrot.slane %v909, 1
  %v990 = vrot.slane %v926, 1
  %v991 = vrot.slane %v943, 1
  %v992 = vrot.slane %v960, 1
  %v993 = vrot.slane %v977, 1
  %994 = vrot.lane.b32.xlu0 %v986, 32
  %v995 = vpop.permute.xlu0 %994
  %996 = vrot.lane.b32.xlu0 %v987, 32
  %v997 = vpop.permute.xlu0 %996
  %998 = vrot.lane.b32.xlu0 %v988, 32
  %v999 = vpop.permute.xlu0 %998
  %1000 = vrot.lane.b32.xlu0 %v989, 32
  %v1001 = vpop.permute.xlu0 %1000
  %1002 = vrot.lane.b32.xlu0 %v990, 32
  %v1003 = vpop.permute.xlu0 %1002
  %1004 = vrot.lane.b32.xlu0 %v991, 32
  %v1005 = vpop.permute.xlu0 %1004
  %1006 = vrot.lane.b32.xlu0 %v992, 32
  %v1007 = vpop.permute.xlu0 %1006
  %1008 = vrot.lane.b32.xlu0 %v993, 32
  %v1009 = vpop.permute.xlu0 %1008
  %v1018 = vcombine.low %v687, %v686
  %v1019 = vcombine.low %v688, %v696
  %v1021 = vunpack.c.l.s4 1983009808
  %v1022 = vunpack.c.0.s8 %v1021
  %v1023 = vlaneseq
  %v1024 = vshrl.u32 %v1023, 7
  %v1025 = vsub.s32 %v1022, %v1024
  %v1026 = vrot.slane %v1018, %v1025
  %v1028 = vunpack.c.l.s4 1983009808
  %v1029 = vunpack.c.0.s8 %v1028
  %v1030 = vlaneseq
  %v1031 = vshrl.u32 %v1030, 7
  %v1032 = vsub.s32 %v1029, %v1031
  %v1033 = vrot.slane %v1019, %v1032
  %v1034 = vcombine.low %v1026, %v1033
  %v1035 = vcombine.low %v703, %v705
  %v1036 = vcombine.low %v713, %v721
  %v1038 = vunpack.c.l.s4 1983009808
  %v1039 = vunpack.c.0.s8 %v1038
  %v1040 = vlaneseq
  %v1041 = vshrl.u32 %v1040, 7
  %v1042 = vsub.s32 %v1039, %v1041
  %v1043 = vrot.slane %v1035, %v1042
  %v1045 = vunpack.c.l.s4 1983009808
  %v1046 = vunpack.c.0.s8 %v1045
  %v1047 = vlaneseq
  %v1048 = vshrl.u32 %v1047, 7
  %v1049 = vsub.s32 %v1046, %v1048
  %v1050 = vrot.slane %v1036, %v1049
  %v1051 = vcombine.low %v1043, %v1050
  %v1052 = vcombine.low %v722, %v730
  %v1053 = vcombine.low %v738, %v737
  %v1055 = vunpack.c.l.s4 1983009808
  %v1056 = vunpack.c.0.s8 %v1055
  %v1057 = vlaneseq
  %v1058 = vshrl.u32 %v1057, 7
  %v1059 = vsub.s32 %v1056, %v1058
  %v1060 = vrot.slane %v1052, %v1059
  %v1062 = vunpack.c.l.s4 1983009808
  %v1063 = vunpack.c.0.s8 %v1062
  %v1064 = vlaneseq
  %v1065 = vshrl.u32 %v1064, 7
  %v1066 = vsub.s32 %v1063, %v1065
  %v1067 = vrot.slane %v1053, %v1066
  %v1068 = vcombine.low %v1060, %v1067
  %v1069 = vcombine.low %v747, %v755
  %v1070 = vcombine.low %v754, %v756
  %v1072 = vunpack.c.l.s4 1983009808
  %v1073 = vunpack.c.0.s8 %v1072
  %v1074 = vlaneseq
  %v1075 = vshrl.u32 %v1074, 7
  %v1076 = vsub.s32 %v1073, %v1075
  %v1077 = vrot.slane %v1069, %v1076
  %v1079 = vunpack.c.l.s4 1983009808
  %v1080 = vunpack.c.0.s8 %v1079
  %v1081 = vlaneseq
  %v1082 = vshrl.u32 %v1081, 7
  %v1083 = vsub.s32 %v1080, %v1082
  %v1084 = vrot.slane %v1070, %v1083
  %v1085 = vcombine.low %v1077, %v1084
  %v1086 = vcombine.low %v772, %v771
  %v1087 = vcombine.low %v773, %v781
  %v1089 = vunpack.c.l.s4 1983009808
  %v1090 = vunpack.c.0.s8 %v1089
  %v1091 = vlaneseq
  %v1092 = vshrl.u32 %v1091, 7
  %v1093 = vsub.s32 %v1090, %v1092
  %v1094 = vrot.slane %v1086, %v1093
  %v1096 = vunpack.c.l.s4 1983009808
  %v1097 = vunpack.c.0.s8 %v1096
  %v1098 = vlaneseq
  %v1099 = vshrl.u32 %v1098, 7
  %v1100 = vsub.s32 %v1097, %v1099
  %v1101 = vrot.slane %v1087, %v1100
  %v1102 = vcombine.low %v1094, %v1101
  %v1103 = vcombine.low %v788, %v790
  %v1104 = vcombine.low %v798, %v806
  %v1106 = vunpack.c.l.s4 1983009808
  %v1107 = vunpack.c.0.s8 %v1106
  %v1108 = vlaneseq
  %v1109 = vshrl.u32 %v1108, 7
  %v1110 = vsub.s32 %v1107, %v1109
  %v1111 = vrot.slane %v1103, %v1110
  %v1113 = vunpack.c.l.s4 1983009808
  %v1114 = vunpack.c.0.s8 %v1113
  %v1115 = vlaneseq
  %v1116 = vshrl.u32 %v1115, 7
  %v1117 = vsub.s32 %v1114, %v1116
  %v1118 = vrot.slane %v1104, %v1117
  %v1119 = vcombine.low %v1111, %v1118
  %v1120 = vcombine.low %v807, %v815
  %v1121 = vcombine.low %v823, %v822
  %v1123 = vunpack.c.l.s4 1983009808
  %v1124 = vunpack.c.0.s8 %v1123
  %v1125 = vlaneseq
  %v1126 = vshrl.u32 %v1125, 7
  %v1127 = vsub.s32 %v1124, %v1126
  %v1128 = vrot.slane %v1120, %v1127
  %v1130 = vunpack.c.l.s4 1983009808
  %v1131 = vunpack.c.0.s8 %v1130
  %v1132 = vlaneseq
  %v1133 = vshrl.u32 %v1132, 7
  %v1134 = vsub.s32 %v1131, %v1133
  %v1135 = vrot.slane %v1121, %v1134
  %v1136 = vcombine.low %v1128, %v1135
  %v1137 = vcombine.low %v832, %v840
  %v1138 = vcombine.low %v839, %v841
  %v1140 = vunpack.c.l.s4 1983009808
  %v1141 = vunpack.c.0.s8 %v1140
  %v1142 = vlaneseq
  %v1143 = vshrl.u32 %v1142, 7
  %v1144 = vsub.s32 %v1141, %v1143
  %v1145 = vrot.slane %v1137, %v1144
  %v1147 = vunpack.c.l.s4 1983009808
  %v1148 = vunpack.c.0.s8 %v1147
  %v1149 = vlaneseq
  %v1150 = vshrl.u32 %v1149, 7
  %v1151 = vsub.s32 %v1148, %v1150
  %v1152 = vrot.slane %v1138, %v1151
  %v1153 = vcombine.low %v1145, %v1152
  %1154 = vrot.lane.b32.xlu0 %v1034, 64
  %v1155 = vpop.permute.xlu0 %1154
  %1156 = vrot.lane.b32.xlu0 %v1051, 64
  %v1157 = vpop.permute.xlu0 %1156
  %1158 = vrot.lane.b32.xlu0 %v1068, 64
  %v1159 = vpop.permute.xlu0 %1158
  %1160 = vrot.lane.b32.xlu0 %v1085, 64
  %v1161 = vpop.permute.xlu0 %1160
  %1162 = vrot.lane.b32.xlu0 %v1102, 64
  %v1163 = vpop.permute.xlu0 %1162
  %1164 = vrot.lane.b32.xlu0 %v1119, 64
  %v1165 = vpop.permute.xlu0 %1164
  %1166 = vrot.lane.b32.xlu0 %v1136, 64
  %v1167 = vpop.permute.xlu0 %1166
  %1168 = vrot.lane.b32.xlu0 %v1153, 64
  %v1169 = vpop.permute.xlu0 %1168
  %v1178 = vrot.slane %v1034, 1
  %v1179 = vrot.slane %v1051, 1
  %v1180 = vrot.slane %v1068, 1
  %v1181 = vrot.slane %v1085, 1
  %v1182 = vrot.slane %v1102, 1
  %v1183 = vrot.slane %v1119, 1
  %v1184 = vrot.slane %v1136, 1
  %v1185 = vrot.slane %v1153, 1
  %1186 = vrot.lane.b32.xlu0 %v1178, 96
  %v1187 = vpop.permute.xlu0 %1186
  %1188 = vrot.lane.b32.xlu0 %v1179, 96
  %v1189 = vpop.permute.xlu0 %1188
  %1190 = vrot.lane.b32.xlu0 %v1180, 96
  %v1191 = vpop.permute.xlu0 %1190
  %1192 = vrot.lane.b32.xlu0 %v1181, 96
  %v1193 = vpop.permute.xlu0 %1192
  %1194 = vrot.lane.b32.xlu0 %v1182, 96
  %v1195 = vpop.permute.xlu0 %1194
  %1196 = vrot.lane.b32.xlu0 %v1183, 96
  %v1197 = vpop.permute.xlu0 %1196
  %1198 = vrot.lane.b32.xlu0 %v1184, 96
  %v1199 = vpop.permute.xlu0 %1198
  %1200 = vrot.lane.b32.xlu0 %v1185, 96
  %v1201 = vpop.permute.xlu0 %1200
  %vm1210 = vcmask 261120
  %v1211 = vsel %vm1210, %v858, %v995
  %v1212 = vsel %vm1210, %v875, %v997
  %v1213 = vsel %vm1210, %v892, %v999
  %v1214 = vsel %vm1210, %v909, %v1001
  %v1215 = vsel %vm1210, %v926, %v1003
  %v1216 = vsel %vm1210, %v943, %v1005
  %v1217 = vsel %vm1210, %v960, %v1007
  %v1218 = vsel %vm1210, %v977, %v1009
  %vm1219 = vcmask 523264
  %v1220 = vsel %vm1219, %v1211, %v1155
  %v1221 = vsel %vm1219, %v1212, %v1157
  %v1222 = vsel %vm1219, %v1213, %v1159
  %v1223 = vsel %vm1219, %v1214, %v1161
  %v1224 = vsel %vm1219, %v1215, %v1163
  %v1225 = vsel %vm1219, %v1216, %v1165
  %v1226 = vsel %vm1219, %v1217, %v1167
  %v1227 = vsel %vm1219, %v1218, %v1169
  %vm1228 = vcmask 785408
  %v1229 = vsel %vm1228, %v1220, %v1187
  %v1230 = vsel %vm1228, %v1221, %v1189
  %v1231 = vsel %vm1228, %v1222, %v1191
  %v1232 = vsel %vm1228, %v1223, %v1193
  %v1233 = vsel %vm1228, %v1224, %v1195
  %v1234 = vsel %vm1228, %v1225, %v1197
  %v1235 = vsel %vm1228, %v1226, %v1199
  %v1236 = vsel %vm1228, %v1227, %v1201
  %v1237 = vld [vmem:[%s2] sm:$0xff]
  %v1238 = vld [vmem:[%s2 + $0x8] sm:$0xff]
  %v1239 = vld [vmem:[%s2 + $0x10] sm:$0xff]
  %v1240 = vld [vmem:[%s2 + $0x18] sm:$0xff]
  %v1241 = vld [vmem:[%s2 + $0x20] sm:$0xff]
  %v1242 = vld [vmem:[%s2 + $0x28] sm:$0xff]
  %v1243 = vld [vmem:[%s2 + $0x30] sm:$0xff]
  %v1244 = vld [vmem:[%s2 + $0x38] sm:$0xff]
  %v1245 = vld [vmem:[%s2 + $0x40] sm:$0xff]
  %v1246 = vld [vmem:[%s2 + $0x48] sm:$0xff]
  %v1247 = vld [vmem:[%s2 + $0x50] sm:$0xff]
  %v1248 = vld [vmem:[%s2 + $0x58] sm:$0xff]
  %v1249 = vld [vmem:[%s2 + $0x60] sm:$0xff]
  %v1250 = vld [vmem:[%s2 + $0x68] sm:$0xff]
  %v1251 = vld [vmem:[%s2 + $0x70] sm:$0xff]
  %v1252 = vld [vmem:[%s2 + $0x78] sm:$0xff]
  %v1261 = vcombine.high %v1229, %v1229
  %v1263 = vunpack.c.l.s4 1966171168
  %v1264 = vunpack.c.0.s8 %v1263
  %v1265 = vlaneseq
  %v1266 = vshrl.u32 %v1265, 7
  %v1267 = vsub.s32 %v1264, %v1266
  %v1268 = vrot.slane %v1229, %v1267
  %v1270 = vunpack.c.l.s4 1966171168
  %v1271 = vunpack.c.0.s8 %v1270
  %v1272 = vlaneseq
  %v1273 = vshrl.u32 %v1272, 7
  %v1274 = vsub.s32 %v1271, %v1273
  %v1275 = vrot.slane %v1261, %v1274
  %v1276 = vcombine.high %v1268, %v1268
  %v1277 = vcombine.high %v1275, %v1275
  %v1279 = vunpack.c.l.s4 1966171168
  %v1280 = vunpack.c.0.s8 %v1279
  %v1281 = vlaneseq
  %v1282 = vshrl.u32 %v1281, 7
  %v1283 = vsub.s32 %v1280, %v1282
  %v1284 = vrot.slane %v1268, %v1283
  %v1286 = vunpack.c.l.s4 1966171168
  %v1287 = vunpack.c.0.s8 %v1286
  %v1288 = vlaneseq
  %v1289 = vshrl.u32 %v1288, 7
  %v1290 = vsub.s32 %v1287, %v1289
  %v1291 = vrot.slane %v1275, %v1290
  %v1293 = vunpack.c.l.s4 1966171168
  %v1294 = vunpack.c.0.s8 %v1293
  %v1295 = vlaneseq
  %v1296 = vshrl.u32 %v1295, 7
  %v1297 = vsub.s32 %v1294, %v1296
  %v1298 = vrot.slane %v1276, %v1297
  %v1300 = vunpack.c.l.s4 1966171168
  %v1301 = vunpack.c.0.s8 %v1300
  %v1302 = vlaneseq
  %v1303 = vshrl.u32 %v1302, 7
  %v1304 = vsub.s32 %v1301, %v1303
  %v1305 = vrot.slane %v1277, %v1304
  %v1306 = vcombine.high %v1284, %v1284
  %v1307 = vcombine.high %v1291, %v1291
  %v1308 = vcombine.high %v1298, %v1298
  %v1309 = vcombine.high %v1230, %v1230
  %v1311 = vunpack.c.l.s4 1966171168
  %v1312 = vunpack.c.0.s8 %v1311
  %v1313 = vlaneseq
  %v1314 = vshrl.u32 %v1313, 7
  %v1315 = vsub.s32 %v1312, %v1314
  %v1316 = vrot.slane %v1230, %v1315
  %v1318 = vunpack.c.l.s4 1966171168
  %v1319 = vunpack.c.0.s8 %v1318
  %v1320 = vlaneseq
  %v1321 = vshrl.u32 %v1320, 7
  %v1322 = vsub.s32 %v1319, %v1321
  %v1323 = vrot.slane %v1309, %v1322
  %v1324 = vcombine.high %v1316, %v1316
  %v1325 = vcombine.high %v1323, %v1323
  %v1327 = vunpack.c.l.s4 1966171168
  %v1328 = vunpack.c.0.s8 %v1327
  %v1329 = vlaneseq
  %v1330 = vshrl.u32 %v1329, 7
  %v1331 = vsub.s32 %v1328, %v1330
  %v1332 = vrot.slane %v1316, %v1331
  %v1334 = vunpack.c.l.s4 1966171168
  %v1335 = vunpack.c.0.s8 %v1334
  %v1336 = vlaneseq
  %v1337 = vshrl.u32 %v1336, 7
  %v1338 = vsub.s32 %v1335, %v1337
  %v1339 = vrot.slane %v1323, %v1338
  %v1341 = vunpack.c.l.s4 1966171168
  %v1342 = vunpack.c.0.s8 %v1341
  %v1343 = vlaneseq
  %v1344 = vshrl.u32 %v1343, 7
  %v1345 = vsub.s32 %v1342, %v1344
  %v1346 = vrot.slane %v1324, %v1345
  %v1348 = vunpack.c.l.s4 1966171168
  %v1349 = vunpack.c.0.s8 %v1348
  %v1350 = vlaneseq
  %v1351 = vshrl.u32 %v1350, 7
  %v1352 = vsub.s32 %v1349, %v1351
  %v1353 = vrot.slane %v1325, %v1352
  %v1354 = vcombine.high %v1332, %v1332
  %v1355 = vcombine.high %v1339, %v1339
  %v1356 = vcombine.high %v1346, %v1346
  %v1357 = vcombine.high %v1231, %v1231
  %v1359 = vunpack.c.l.s4 1966171168
  %v1360 = vunpack.c.0.s8 %v1359
  %v1361 = vlaneseq
  %v1362 = vshrl.u32 %v1361, 7
  %v1363 = vsub.s32 %v1360, %v1362
  %v1364 = vrot.slane %v1231, %v1363
  %v1366 = vunpack.c.l.s4 1966171168
  %v1367 = vunpack.c.0.s8 %v1366
  %v1368 = vlaneseq
  %v1369 = vshrl.u32 %v1368, 7
  %v1370 = vsub.s32 %v1367, %v1369
  %v1371 = vrot.slane %v1357, %v1370
  %v1372 = vcombine.high %v1364, %v1364
  %v1373 = vcombine.high %v1371, %v1371
  %v1375 = vunpack.c.l.s4 1966171168
  %v1376 = vunpack.c.0.s8 %v1375
  %v1377 = vlaneseq
  %v1378 = vshrl.u32 %v1377, 7
  %v1379 = vsub.s32 %v1376, %v1378
  %v1380 = vrot.slane %v1364, %v1379
  %v1382 = vunpack.c.l.s4 1966171168
  %v1383 = vunpack.c.0.s8 %v1382
  %v1384 = vlaneseq
  %v1385 = vshrl.u32 %v1384, 7
  %v1386 = vsub.s32 %v1383, %v1385
  %v1387 = vrot.slane %v1371, %v1386
  %v1389 = vunpack.c.l.s4 1966171168
  %v1390 = vunpack.c.0.s8 %v1389
  %v1391 = vlaneseq
  %v1392 = vshrl.u32 %v1391, 7
  %v1393 = vsub.s32 %v1390, %v1392
  %v1394 = vrot.slane %v1372, %v1393
  %v1396 = vunpack.c.l.s4 1966171168
  %v1397 = vunpack.c.0.s8 %v1396
  %v1398 = vlaneseq
  %v1399 = vshrl.u32 %v1398, 7
  %v1400 = vsub.s32 %v1397, %v1399
  %v1401 = vrot.slane %v1373, %v1400
  %v1402 = vcombine.high %v1380, %v1380
  %v1403 = vcombine.high %v1387, %v1387
  %v1404 = vcombine.high %v1394, %v1394
  %v1405 = vcombine.high %v1232, %v1232
  %v1407 = vunpack.c.l.s4 1966171168
  %v1408 = vunpack.c.0.s8 %v1407
  %v1409 = vlaneseq
  %v1410 = vshrl.u32 %v1409, 7
  %v1411 = vsub.s32 %v1408, %v1410
  %v1412 = vrot.slane %v1232, %v1411
  %v1414 = vunpack.c.l.s4 1966171168
  %v1415 = vunpack.c.0.s8 %v1414
  %v1416 = vlaneseq
  %v1417 = vshrl.u32 %v1416, 7
  %v1418 = vsub.s32 %v1415, %v1417
  %v1419 = vrot.slane %v1405, %v1418
  %v1420 = vcombine.high %v1412, %v1412
  %v1421 = vcombine.high %v1419, %v1419
  %v1423 = vunpack.c.l.s4 1966171168
  %v1424 = vunpack.c.0.s8 %v1423
  %v1425 = vlaneseq
  %v1426 = vshrl.u32 %v1425, 7
  %v1427 = vsub.s32 %v1424, %v1426
  %v1428 = vrot.slane %v1412, %v1427
  %v1430 = vunpack.c.l.s4 1966171168
  %v1431 = vunpack.c.0.s8 %v1430
  %v1432 = vlaneseq
  %v1433 = vshrl.u32 %v1432, 7
  %v1434 = vsub.s32 %v1431, %v1433
  %v1435 = vrot.slane %v1419, %v1434
  %v1437 = vunpack.c.l.s4 1966171168
  %v1438 = vunpack.c.0.s8 %v1437
  %v1439 = vlaneseq
  %v1440 = vshrl.u32 %v1439, 7
  %v1441 = vsub.s32 %v1438, %v1440
  %v1442 = vrot.slane %v1420, %v1441
  %v1444 = vunpack.c.l.s4 1966171168
  %v1445 = vunpack.c.0.s8 %v1444
  %v1446 = vlaneseq
  %v1447 = vshrl.u32 %v1446, 7
  %v1448 = vsub.s32 %v1445, %v1447
  %v1449 = vrot.slane %v1421, %v1448
  %v1450 = vcombine.high %v1428, %v1428
  %v1451 = vcombine.high %v1435, %v1435
  %v1452 = vcombine.high %v1442, %v1442
  %v1453 = vcombine.high %v1233, %v1233
  %v1455 = vunpack.c.l.s4 1966171168
  %v1456 = vunpack.c.0.s8 %v1455
  %v1457 = vlaneseq
  %v1458 = vshrl.u32 %v1457, 7
  %v1459 = vsub.s32 %v1456, %v1458
  %v1460 = vrot.slane %v1233, %v1459
  %v1462 = vunpack.c.l.s4 1966171168
  %v1463 = vunpack.c.0.s8 %v1462
  %v1464 = vlaneseq
  %v1465 = vshrl.u32 %v1464, 7
  %v1466 = vsub.s32 %v1463, %v1465
  %v1467 = vrot.slane %v1453, %v1466
  %v1468 = vcombine.high %v1460, %v1460
  %v1469 = vcombine.high %v1467, %v1467
  %v1471 = vunpack.c.l.s4 1966171168
  %v1472 = vunpack.c.0.s8 %v1471
  %v1473 = vlaneseq
  %v1474 = vshrl.u32 %v1473, 7
  %v1475 = vsub.s32 %v1472, %v1474
  %v1476 = vrot.slane %v1460, %v1475
  %v1478 = vunpack.c.l.s4 1966171168
  %v1479 = vunpack.c.0.s8 %v1478
  %v1480 = vlaneseq
  %v1481 = vshrl.u32 %v1480, 7
  %v1482 = vsub.s32 %v1479, %v1481
  %v1483 = vrot.slane %v1467, %v1482
  %v1485 = vunpack.c.l.s4 1966171168
  %v1486 = vunpack.c.0.s8 %v1485
  %v1487 = vlaneseq
  %v1488 = vshrl.u32 %v1487, 7
  %v1489 = vsub.s32 %v1486, %v1488
  %v1490 = vrot.slane %v1468, %v1489
  %v1492 = vunpack.c.l.s4 1966171168
  %v1493 = vunpack.c.0.s8 %v1492
  %v1494 = vlaneseq
  %v1495 = vshrl.u32 %v1494, 7
  %v1496 = vsub.s32 %v1493, %v1495
  %v1497 = vrot.slane %v1469, %v1496
  %v1498 = vcombine.high %v1476, %v1476
  %v1499 = vcombine.high %v1483, %v1483
  %v1500 = vcombine.high %v1490, %v1490
  %v1501 = vcombine.high %v1234, %v1234
  %v1503 = vunpack.c.l.s4 1966171168
  %v1504 = vunpack.c.0.s8 %v1503
  %v1505 = vlaneseq
  %v1506 = vshrl.u32 %v1505, 7
  %v1507 = vsub.s32 %v1504, %v1506
  %v1508 = vrot.slane %v1234, %v1507
  %v1510 = vunpack.c.l.s4 1966171168
  %v1511 = vunpack.c.0.s8 %v1510
  %v1512 = vlaneseq
  %v1513 = vshrl.u32 %v1512, 7
  %v1514 = vsub.s32 %v1511, %v1513
  %v1515 = vrot.slane %v1501, %v1514
  %v1516 = vcombine.high %v1508, %v1508
  %v1517 = vcombine.high %v1515, %v1515
  %v1519 = vunpack.c.l.s4 1966171168
  %v1520 = vunpack.c.0.s8 %v1519
  %v1521 = vlaneseq
  %v1522 = vshrl.u32 %v1521, 7
  %v1523 = vsub.s32 %v1520, %v1522
  %v1524 = vrot.slane %v1508, %v1523
  %v1526 = vunpack.c.l.s4 1966171168
  %v1527 = vunpack.c.0.s8 %v1526
  %v1528 = vlaneseq
  %v1529 = vshrl.u32 %v1528, 7
  %v1530 = vsub.s32 %v1527, %v1529
  %v1531 = vrot.slane %v1515, %v1530
  %v1533 = vunpack.c.l.s4 1966171168
  %v1534 = vunpack.c.0.s8 %v1533
  %v1535 = vlaneseq
  %v1536 = vshrl.u32 %v1535, 7
  %v1537 = vsub.s32 %v1534, %v1536
  %v1538 = vrot.slane %v1516, %v1537
  %v1540 = vunpack.c.l.s4 1966171168
  %v1541 = vunpack.c.0.s8 %v1540
  %v1542 = vlaneseq
  %v1543 = vshrl.u32 %v1542, 7
  %v1544 = vsub.s32 %v1541, %v1543
  %v1545 = vrot.slane %v1517, %v1544
  %v1546 = vcombine.high %v1524, %v1524
  %v1547 = vcombine.high %v1531, %v1531
  %v1548 = vcombine.high %v1538, %v1538
  %v1549 = vcombine.high %v1235, %v1235
  %v1551 = vunpack.c.l.s4 1966171168
  %v1552 = vunpack.c.0.s8 %v1551
  %v1553 = vlaneseq
  %v1554 = vshrl.u32 %v1553, 7
  %v1555 = vsub.s32 %v1552, %v1554
  %v1556 = vrot.slane %v1235, %v1555
  %v1558 = vunpack.c.l.s4 1966171168
  %v1559 = vunpack.c.0.s8 %v1558
  %v1560 = vlaneseq
  %v1561 = vshrl.u32 %v1560, 7
  %v1562 = vsub.s32 %v1559, %v1561
  %v1563 = vrot.slane %v1549, %v1562
  %v1564 = vcombine.high %v1556, %v1556
  %v1565 = vcombine.high %v1563, %v1563
  %v1567 = vunpack.c.l.s4 1966171168
  %v1568 = vunpack.c.0.s8 %v1567
  %v1569 = vlaneseq
  %v1570 = vshrl.u32 %v1569, 7
  %v1571 = vsub.s32 %v1568, %v1570
  %v1572 = vrot.slane %v1556, %v1571
  %v1574 = vunpack.c.l.s4 1966171168
  %v1575 = vunpack.c.0.s8 %v1574
  %v1576 = vlaneseq
  %v1577 = vshrl.u32 %v1576, 7
  %v1578 = vsub.s32 %v1575, %v1577
  %v1579 = vrot.slane %v1563, %v1578
  %v1581 = vunpack.c.l.s4 1966171168
  %v1582 = vunpack.c.0.s8 %v1581
  %v1583 = vlaneseq
  %v1584 = vshrl.u32 %v1583, 7
  %v1585 = vsub.s32 %v1582, %v1584
  %v1586 = vrot.slane %v1564, %v1585
  %v1588 = vunpack.c.l.s4 1966171168
  %v1589 = vunpack.c.0.s8 %v1588
  %v1590 = vlaneseq
  %v1591 = vshrl.u32 %v1590, 7
  %v1592 = vsub.s32 %v1589, %v1591
  %v1593 = vrot.slane %v1565, %v1592
  %v1594 = vcombine.high %v1572, %v1572
  %v1595 = vcombine.high %v1579, %v1579
  %v1596 = vcombine.high %v1586, %v1586
  %v1597 = vcombine.high %v1236, %v1236
  %v1599 = vunpack.c.l.s4 1966171168
  %v1600 = vunpack.c.0.s8 %v1599
  %v1601 = vlaneseq
  %v1602 = vshrl.u32 %v1601, 7
  %v1603 = vsub.s32 %v1600, %v1602
  %v1604 = vrot.slane %v1236, %v1603
  %v1606 = vunpack.c.l.s4 1966171168
  %v1607 = vunpack.c.0.s8 %v1606
  %v1608 = vlaneseq
  %v1609 = vshrl.u32 %v1608, 7
  %v1610 = vsub.s32 %v1607, %v1609
  %v1611 = vrot.slane %v1597, %v1610
  %v1612 = vcombine.high %v1604, %v1604
  %v1613 = vcombine.high %v1611, %v1611
  %v1615 = vunpack.c.l.s4 1966171168
  %v1616 = vunpack.c.0.s8 %v1615
  %v1617 = vlaneseq
  %v1618 = vshrl.u32 %v1617, 7
  %v1619 = vsub.s32 %v1616, %v1618
  %v1620 = vrot.slane %v1604, %v1619
  %v1622 = vunpack.c.l.s4 1966171168
  %v1623 = vunpack.c.0.s8 %v1622
  %v1624 = vlaneseq
  %v1625 = vshrl.u32 %v1624, 7
  %v1626 = vsub.s32 %v1623, %v1625
  %v1627 = vrot.slane %v1611, %v1626
  %v1629 = vunpack.c.l.s4 1966171168
  %v1630 = vunpack.c.0.s8 %v1629
  %v1631 = vlaneseq
  %v1632 = vshrl.u32 %v1631, 7
  %v1633 = vsub.s32 %v1630, %v1632
  %v1634 = vrot.slane %v1612, %v1633
  %v1636 = vunpack.c.l.s4 1966171168
  %v1637 = vunpack.c.0.s8 %v1636
  %v1638 = vlaneseq
  %v1639 = vshrl.u32 %v1638, 7
  %v1640 = vsub.s32 %v1637, %v1639
  %v1641 = vrot.slane %v1613, %v1640
  %v1642 = vcombine.high %v1620, %v1620
  %v1643 = vcombine.high %v1627, %v1627
  %v1644 = vcombine.high %v1634, %v1634
  %v1645 = vcombine.low %v1284, %v1298
  %v1646 = vcombine.low %v1306, %v1308
  %v1647 = vcombine.low %v1291, %v1305
  %v1648 = vcombine.low %v1307, %v1332
  %v1650 = vunpack.c.l.s4 1966171168
  %v1651 = vunpack.c.0.s8 %v1650
  %v1652 = vlaneseq
  %v1653 = vshrl.u32 %v1652, 7
  %v1654 = vsub.s32 %v1651, %v1653
  %v1655 = vrot.slane %v1645, %v1654
  %v1657 = vunpack.c.l.s4 1966171168
  %v1658 = vunpack.c.0.s8 %v1657
  %v1659 = vlaneseq
  %v1660 = vshrl.u32 %v1659, 7
  %v1661 = vsub.s32 %v1658, %v1660
  %v1662 = vrot.slane %v1646, %v1661
  %v1664 = vunpack.c.l.s4 1966171168
  %v1665 = vunpack.c.0.s8 %v1664
  %v1666 = vlaneseq
  %v1667 = vshrl.u32 %v1666, 7
  %v1668 = vsub.s32 %v1665, %v1667
  %v1669 = vrot.slane %v1647, %v1668
  %v1671 = vunpack.c.l.s4 1966171168
  %v1672 = vunpack.c.0.s8 %v1671
  %v1673 = vlaneseq
  %v1674 = vshrl.u32 %v1673, 7
  %v1675 = vsub.s32 %v1672, %v1674
  %v1676 = vrot.slane %v1648, %v1675
  %v1677 = vcombine.low %v1655, %v1662
  %v1678 = vcombine.low %v1669, %v1676
  %v1680 = vunpack.c.l.s4 1966171168
  %v1681 = vunpack.c.0.s8 %v1680
  %v1682 = vlaneseq
  %v1683 = vshrl.u32 %v1682, 7
  %v1684 = vsub.s32 %v1681, %v1683
  %v1685 = vrot.slane %v1677, %v1684
  %v1687 = vunpack.c.l.s4 1966171168
  %v1688 = vunpack.c.0.s8 %v1687
  %v1689 = vlaneseq
  %v1690 = vshrl.u32 %v1689, 7
  %v1691 = vsub.s32 %v1688, %v1690
  %v1692 = vrot.slane %v1678, %v1691
  %v1693 = vcombine.low %v1685, %v1692
  %v1694 = vcombine.low %v1346, %v1354
  %v1695 = vcombine.low %v1356, %v1339
  %v1696 = vcombine.low %v1353, %v1355
  %v1697 = vcombine.low %v1380, %v1394
  %v1699 = vunpack.c.l.s4 1966171168
  %v1700 = vunpack.c.0.s8 %v1699
  %v1701 = vlaneseq
  %v1702 = vshrl.u32 %v1701, 7
  %v1703 = vsub.s32 %v1700, %v1702
  %v1704 = vrot.slane %v1694, %v1703
  %v1706 = vunpack.c.l.s4 1966171168
  %v1707 = vunpack.c.0.s8 %v1706
  %v1708 = vlaneseq
  %v1709 = vshrl.u32 %v1708, 7
  %v1710 = vsub.s32 %v1707, %v1709
  %v1711 = vrot.slane %v1695, %v1710
  %v1713 = vunpack.c.l.s4 1966171168
  %v1714 = vunpack.c.0.s8 %v1713
  %v1715 = vlaneseq
  %v1716 = vshrl.u32 %v1715, 7
  %v1717 = vsub.s32 %v1714, %v1716
  %v1718 = vrot.slane %v1696, %v1717
  %v1720 = vunpack.c.l.s4 1966171168
  %v1721 = vunpack.c.0.s8 %v1720
  %v1722 = vlaneseq
  %v1723 = vshrl.u32 %v1722, 7
  %v1724 = vsub.s32 %v1721, %v1723
  %v1725 = vrot.slane %v1697, %v1724
  %v1726 = vcombine.low %v1704, %v1711
  %v1727 = vcombine.low %v1718, %v1725
  %v1729 = vunpack.c.l.s4 1966171168
  %v1730 = vunpack.c.0.s8 %v1729
  %v1731 = vlaneseq
  %v1732 = vshrl.u32 %v1731, 7
  %v1733 = vsub.s32 %v1730, %v1732
  %v1734 = vrot.slane %v1726, %v1733
  %v1736 = vunpack.c.l.s4 1966171168
  %v1737 = vunpack.c.0.s8 %v1736
  %v1738 = vlaneseq
  %v1739 = vshrl.u32 %v1738, 7
  %v1740 = vsub.s32 %v1737, %v1739
  %v1741 = vrot.slane %v1727, %v1740
  %v1742 = vcombine.low %v1734, %v1741
  %v1743 = vcombine.low %v1402, %v1404
  %v1744 = vcombine.low %v1387, %v1401
  %v1745 = vcombine.low %v1403, %v1428
  %v1746 = vcombine.low %v1442, %v1450
  %v1748 = vunpack.c.l.s4 1966171168
  %v1749 = vunpack.c.0.s8 %v1748
  %v1750 = vlaneseq
  %v1751 = vshrl.u32 %v1750, 7
  %v1752 = vsub.s32 %v1749, %v1751
  %v1753 = vrot.slane %v1743, %v1752
  %v1755 = vunpack.c.l.s4 1966171168
  %v1756 = vunpack.c.0.s8 %v1755
  %v1757 = vlaneseq
  %v1758 = vshrl.u32 %v1757, 7
  %v1759 = vsub.s32 %v1756, %v1758
  %v1760 = vrot.slane %v1744, %v1759
  %v1762 = vunpack.c.l.s4 1966171168
  %v1763 = vunpack.c.0.s8 %v1762
  %v1764 = vlaneseq
  %v1765 = vshrl.u32 %v1764, 7
  %v1766 = vsub.s32 %v1763, %v1765
  %v1767 = vrot.slane %v1745, %v1766
  %v1769 = vunpack.c.l.s4 1966171168
  %v1770 = vunpack.c.0.s8 %v1769
  %v1771 = vlaneseq
  %v1772 = vshrl.u32 %v1771, 7
  %v1773 = vsub.s32 %v1770, %v1772
  %v1774 = vrot.slane %v1746, %v1773
  %v1775 = vcombine.low %v1753, %v1760
  %v1776 = vcombine.low %v1767, %v1774
  %v1778 = vunpack.c.l.s4 1966171168
  %v1779 = vunpack.c.0.s8 %v1778
  %v1780 = vlaneseq
  %v1781 = vshrl.u32 %v1780, 7
  %v1782 = vsub.s32 %v1779, %v1781
  %v1783 = vrot.slane %v1775, %v1782
  %v1785 = vunpack.c.l.s4 1966171168
  %v1786 = vunpack.c.0.s8 %v1785
  %v1787 = vlaneseq
  %v1788 = vshrl.u32 %v1787, 7
  %v1789 = vsub.s32 %v1786, %v1788
  %v1790 = vrot.slane %v1776, %v1789
  %v1791 = vcombine.low %v1783, %v1790
  %v1792 = vcombine.low %v1452, %v1435
  %v1793 = vcombine.low %v1449, %v1451
  %v1794 = vcombine.low %v1476, %v1490
  %v1795 = vcombine.low %v1498, %v1500
  %v1797 = vunpack.c.l.s4 1966171168
  %v1798 = vunpack.c.0.s8 %v1797
  %v1799 = vlaneseq
  %v1800 = vshrl.u32 %v1799, 7
  %v1801 = vsub.s32 %v1798, %v1800
  %v1802 = vrot.slane %v1792, %v1801
  %v1804 = vunpack.c.l.s4 1966171168
  %v1805 = vunpack.c.0.s8 %v1804
  %v1806 = vlaneseq
  %v1807 = vshrl.u32 %v1806, 7
  %v1808 = vsub.s32 %v1805, %v1807
  %v1809 = vrot.slane %v1793, %v1808
  %v1811 = vunpack.c.l.s4 1966171168
  %v1812 = vunpack.c.0.s8 %v1811
  %v1813 = vlaneseq
  %v1814 = vshrl.u32 %v1813, 7
  %v1815 = vsub.s32 %v1812, %v1814
  %v1816 = vrot.slane %v1794, %v1815
  %v1818 = vunpack.c.l.s4 1966171168
  %v1819 = vunpack.c.0.s8 %v1818
  %v1820 = vlaneseq
  %v1821 = vshrl.u32 %v1820, 7
  %v1822 = vsub.s32 %v1819, %v1821
  %v1823 = vrot.slane %v1795, %v1822
  %v1824 = vcombine.low %v1802, %v1809
  %v1825 = vcombine.low %v1816, %v1823
  %v1827 = vunpack.c.l.s4 1966171168
  %v1828 = vunpack.c.0.s8 %v1827
  %v1829 = vlaneseq
  %v1830 = vshrl.u32 %v1829, 7
  %v1831 = vsub.s32 %v1828, %v1830
  %v1832 = vrot.slane %v1824, %v1831
  %v1834 = vunpack.c.l.s4 1966171168
  %v1835 = vunpack.c.0.s8 %v1834
  %v1836 = vlaneseq
  %v1837 = vshrl.u32 %v1836, 7
  %v1838 = vsub.s32 %v1835, %v1837
  %v1839 = vrot.slane %v1825, %v1838
  %v1840 = vcombine.low %v1832, %v1839
  %v1841 = vcombine.low %v1483, %v1497
  %v1842 = vcombine.low %v1499, %v1524
  %v1843 = vcombine.low %v1538, %v1546
  %v1844 = vcombine.low %v1548, %v1531
  %v1846 = vunpack.c.l.s4 1966171168
  %v1847 = vunpack.c.0.s8 %v1846
  %v1848 = vlaneseq
  %v1849 = vshrl.u32 %v1848, 7
  %v1850 = vsub.s32 %v1847, %v1849
  %v1851 = vrot.slane %v1841, %v1850
  %v1853 = vunpack.c.l.s4 1966171168
  %v1854 = vunpack.c.0.s8 %v1853
  %v1855 = vlaneseq
  %v1856 = vshrl.u32 %v1855, 7
  %v1857 = vsub.s32 %v1854, %v1856
  %v1858 = vrot.slane %v1842, %v1857
  %v1860 = vunpack.c.l.s4 1966171168
  %v1861 = vunpack.c.0.s8 %v1860
  %v1862 = vlaneseq
  %v1863 = vshrl.u32 %v1862, 7
  %v1864 = vsub.s32 %v1861, %v1863
  %v1865 = vrot.slane %v1843, %v1864
  %v1867 = vunpack.c.l.s4 1966171168
  %v1868 = vunpack.c.0.s8 %v1867
  %v1869 = vlaneseq
  %v1870 = vshrl.u32 %v1869, 7
  %v1871 = vsub.s32 %v1868, %v1870
  %v1872 = vrot.slane %v1844, %v1871
  %v1873 = vcombine.low %v1851, %v1858
  %v1874 = vcombine.low %v1865, %v1872
  %v1876 = vunpack.c.l.s4 1966171168
  %v1877 = vunpack.c.0.s8 %v1876
  %v1878 = vlaneseq
  %v1879 = vshrl.u32 %v1878, 7
  %v1880 = vsub.s32 %v1877, %v1879
  %v1881 = vrot.slane %v1873, %v1880
  %v1883 = vunpack.c.l.s4 1966171168
  %v1884 = vunpack.c.0.s8 %v1883
  %v1885 = vlaneseq
  %v1886 = vshrl.u32 %v1885, 7
  %v1887 = vsub.s32 %v1884, %v1886
  %v1888 = vrot.slane %v1874, %v1887
  %v1889 = vcombine.low %v1881, %v1888
  %v1890 = vcombine.low %v1545, %v1547
  %v1891 = vcombine.low %v1572, %v1586
  %v1892 = vcombine.low %v1594, %v1596
  %v1893 = vcombine.low %v1579, %v1593
  %v1895 = vunpack.c.l.s4 1966171168
  %v1896 = vunpack.c.0.s8 %v1895
  %v1897 = vlaneseq
  %v1898 = vshrl.u32 %v1897, 7
  %v1899 = vsub.s32 %v1896, %v1898
  %v1900 = vrot.slane %v1890, %v1899
  %v1902 = vunpack.c.l.s4 1966171168
  %v1903 = vunpack.c.0.s8 %v1902
  %v1904 = vlaneseq
  %v1905 = vshrl.u32 %v1904, 7
  %v1906 = vsub.s32 %v1903, %v1905
  %v1907 = vrot.slane %v1891, %v1906
  %v1909 = vunpack.c.l.s4 1966171168
  %v1910 = vunpack.c.0.s8 %v1909
  %v1911 = vlaneseq
  %v1912 = vshrl.u32 %v1911, 7
  %v1913 = vsub.s32 %v1910, %v1912
  %v1914 = vrot.slane %v1892, %v1913
  %v1916 = vunpack.c.l.s4 1966171168
  %v1917 = vunpack.c.0.s8 %v1916
  %v1918 = vlaneseq
  %v1919 = vshrl.u32 %v1918, 7
  %v1920 = vsub.s32 %v1917, %v1919
  %v1921 = vrot.slane %v1893, %v1920
  %v1922 = vcombine.low %v1900, %v1907
  %v1923 = vcombine.low %v1914, %v1921
  %v1925 = vunpack.c.l.s4 1966171168
  %v1926 = vunpack.c.0.s8 %v1925
  %v1927 = vlaneseq
  %v1928 = vshrl.u32 %v1927, 7
  %v1929 = vsub.s32 %v1926, %v1928
  %v1930 = vrot.slane %v1922, %v1929
  %v1932 = vunpack.c.l.s4 1966171168
  %v1933 = vunpack.c.0.s8 %v1932
  %v1934 = vlaneseq
  %v1935 = vshrl.u32 %v1934, 7
  %v1936 = vsub.s32 %v1933, %v1935
  %v1937 = vrot.slane %v1923, %v1936
  %v1938 = vcombine.low %v1930, %v1937
  %v1939 = vcombine.low %v1595, %v1620
  %v1940 = vcombine.low %v1634, %v1642
  %v1941 = vcombine.low %v1644, %v1627
  %v1942 = vcombine.low %v1641, %v1643
  %v1944 = vunpack.c.l.s4 1966171168
  %v1945 = vunpack.c.0.s8 %v1944
  %v1946 = vlaneseq
  %v1947 = vshrl.u32 %v1946, 7
  %v1948 = vsub.s32 %v1945, %v1947
  %v1949 = vrot.slane %v1939, %v1948
  %v1951 = vunpack.c.l.s4 1966171168
  %v1952 = vunpack.c.0.s8 %v1951
  %v1953 = vlaneseq
  %v1954 = vshrl.u32 %v1953, 7
  %v1955 = vsub.s32 %v1952, %v1954
  %v1956 = vrot.slane %v1940, %v1955
  %v1958 = vunpack.c.l.s4 1966171168
  %v1959 = vunpack.c.0.s8 %v1958
  %v1960 = vlaneseq
  %v1961 = vshrl.u32 %v1960, 7
  %v1962 = vsub.s32 %v1959, %v1961
  %v1963 = vrot.slane %v1941, %v1962
  %v1965 = vunpack.c.l.s4 1966171168
  %v1966 = vunpack.c.0.s8 %v1965
  %v1967 = vlaneseq
  %v1968 = vshrl.u32 %v1967, 7
  %v1969 = vsub.s32 %v1966, %v1968
  %v1970 = vrot.slane %v1942, %v1969
  %v1971 = vcombine.low %v1949, %v1956
  %v1972 = vcombine.low %v1963, %v1970
  %v1974 = vunpack.c.l.s4 1966171168
  %v1975 = vunpack.c.0.s8 %v1974
  %v1976 = vlaneseq
  %v1977 = vshrl.u32 %v1976, 7
  %v1978 = vsub.s32 %v1975, %v1977
  %v1979 = vrot.slane %v1971, %v1978
  %v1981 = vunpack.c.l.s4 1966171168
  %v1982 = vunpack.c.0.s8 %v1981
  %v1983 = vlaneseq
  %v1984 = vshrl.u32 %v1983, 7
  %v1985 = vsub.s32 %v1982, %v1984
  %v1986 = vrot.slane %v1972, %v1985
  %v1987 = vcombine.low %v1979, %v1986
  %1995 = vmatprep.subr.mxu0 0.0
  %1996 = vmatpush1.msra.mxu0 %v1252
  %1997 = vmatprep.subr.mxu0 0.0
  %1998 = vmatpush1.msra.mxu0 %v1251
  %1999 = vmatprep.subr.mxu0 0.0
  %2000 = vmatpush1.msra.mxu0 %v1250
  %2001 = vmatprep.subr.mxu0 0.0
  %2002 = vmatpush1.msra.mxu0 %v1249
  %2003 = vmatprep.subr.mxu0 0.0
  %2004 = vmatpush1.msra.mxu0 %v1248
  %2005 = vmatprep.subr.mxu0 0.0
  %2006 = vmatpush1.msra.mxu0 %v1247
  %2007 = vmatprep.subr.mxu0 0.0
  %2008 = vmatpush1.msra.mxu0 %v1246
  %2009 = vmatprep.subr.mxu0 0.0
  %2010 = vmatpush1.msra.mxu0 %v1245
  %2011 = vmatprep.subr.mxu0 0.0
  %2012 = vmatpush1.msra.mxu0 %v1244
  %2013 = vmatprep.subr.mxu0 0.0
  %2014 = vmatpush1.msra.mxu0 %v1243
  %2015 = vmatprep.subr.mxu0 0.0
  %2016 = vmatpush1.msra.mxu0 %v1242
  %2017 = vmatprep.subr.mxu0 0.0
  %2018 = vmatpush1.msra.mxu0 %v1241
  %2019 = vmatprep.subr.mxu0 0.0
  %2020 = vmatpush1.msra.mxu0 %v1240
  %2021 = vmatprep.subr.mxu0 0.0
  %2022 = vmatpush1.msra.mxu0 %v1239
  %2023 = vmatprep.subr.mxu0 0.0
  %2024 = vmatpush1.msra.mxu0 %v1238
  %2025 = vmatprep.subr.mxu0 0.0
  %2026 = vmatpush1.msra.mxu0 %v1237
  %2027 = vmatprep.subr.mxu0 0.0
  %2028 = vmatpush2.msra.mxu0 0.0
  %2029 = vmatprep.subr.mxu0 0.0
  %2030 = vmatpush2.msra.mxu0 0.0
  %2031 = vmatprep.subr.mxu0 0.0
  %2032 = vmatpush2.msra.mxu0 0.0
  %2033 = vmatprep.subr.mxu0 0.0
  %2034 = vmatpush2.msra.mxu0 0.0
  %2035 = vmatprep.subr.mxu0 0.0
  %2036 = vmatpush2.msra.mxu0 0.0
  %2037 = vmatprep.subr.mxu0 0.0
  %2038 = vmatpush2.msra.mxu0 0.0
  %2039 = vmatprep.subr.mxu0 0.0
  %2040 = vmatpush2.msra.mxu0 0.0
  %2041 = vmatprep.subr.mxu0 0.0
  %2042 = vmatpush2.msra.mxu0 0.0
  %2043 = vmatprep.subr.mxu0 0.0
  %2044 = vmatpush2.msra.mxu0 0.0
  %2045 = vmatprep.subr.mxu0 0.0
  %2046 = vmatpush2.msra.mxu0 0.0
  %2047 = vmatprep.subr.mxu0 0.0
  %2048 = vmatpush2.msra.mxu0 0.0
  %2049 = vmatprep.subr.mxu0 0.0
  %2050 = vmatpush2.msra.mxu0 0.0
  %2051 = vmatprep.subr.mxu0 0.0
  %2052 = vmatpush2.msra.mxu0 0.0
  %2053 = vmatprep.subr.mxu0 0.0
  %2054 = vmatpush2.msra.mxu0 0.0
  %2055 = vmatprep.subr.mxu0 0.0
  %2056 = vmatpush2.msra.mxu0 0.0
  %2057 = vmatprep.subr.mxu0 0.0
  %2058 = vmatpush2.msra.mxu0 0.0
  %2059 = vmatprep.mubr.f32.mxu0 0.0
  %2060 = vmatmul.mubr.f32.gmra.mxu0 %v1693
  %v2061 = vpop.f32.mrf.mxu0
  %v2062 = vadd.f32 0.0, %v2061
  %v2063 = vpop.f32.mrf.mxu0
  %2064 = vmatprep.mubr.f32.mxu0 0.0
  %2065 = vmatmul.mubr.f32.gmra.mxu0 %v1742
  %v2066 = vpop.f32.mrf.mxu0
  %v2067 = vadd.f32 0.0, %v2066
  %v2068 = vpop.f32.mrf.mxu0
  %2069 = vmatprep.mubr.f32.mxu0 0.0
  %2070 = vmatmul.mubr.f32.gmra.mxu0 %v1791
  %v2071 = vpop.f32.mrf.mxu0
  %v2072 = vadd.f32 0.0, %v2071
  %v2073 = vpop.f32.mrf.mxu0
  %2074 = vmatprep.mubr.f32.mxu0 0.0
  %2075 = vmatmul.mubr.f32.gmra.mxu0 %v1840
  %v2076 = vpop.f32.mrf.mxu0
  %v2077 = vadd.f32 0.0, %v2076
  %v2078 = vpop.f32.mrf.mxu0
  %2079 = vmatprep.mubr.f32.mxu0 0.0
  %2080 = vmatmul.mubr.f32.gmra.mxu0 %v1889
  %v2081 = vpop.f32.mrf.mxu0
  %v2082 = vadd.f32 0.0, %v2081
  %v2083 = vpop.f32.mrf.mxu0
  %2084 = vmatprep.mubr.f32.mxu0 0.0
  %2085 = vmatmul.mubr.f32.gmra.mxu0 %v1938
  %v2086 = vpop.f32.mrf.mxu0
  %v2087 = vadd.f32 0.0, %v2086
  %v2088 = vpop.f32.mrf.mxu0
  %2089 = vmatprep.mubr.f32.mxu0 0.0
  %2090 = vmatmul.mubr.f32.gmra.mxu0 %v1987
  %v2091 = vpop.f32.mrf.mxu0
  %v2092 = vadd.f32 0.0, %v2091
  %v2093 = vpop.f32.mrf.mxu0
  %2094 = vdwg.mxu0
  %v2102 = vcombine.high %v2062, %v2062
  %v2104 = vunpack.c.l.s4 1966171168
  %v2105 = vunpack.c.0.s8 %v2104
  %v2106 = vlaneseq
  %v2107 = vshrl.u32 %v2106, 7
  %v2108 = vsub.s32 %v2105, %v2107
  %v2109 = vrot.slane %v2062, %v2108
  %v2111 = vunpack.c.l.s4 1966171168
  %v2112 = vunpack.c.0.s8 %v2111
  %v2113 = vlaneseq
  %v2114 = vshrl.u32 %v2113, 7
  %v2115 = vsub.s32 %v2112, %v2114
  %v2116 = vrot.slane %v2102, %v2115
  %v2117 = vcombine.high %v2109, %v2109
  %v2118 = vcombine.high %v2116, %v2116
  %v2120 = vunpack.c.l.s4 1966171168
  %v2121 = vunpack.c.0.s8 %v2120
  %v2122 = vlaneseq
  %v2123 = vshrl.u32 %v2122, 7
  %v2124 = vsub.s32 %v2121, %v2123
  %v2125 = vrot.slane %v2109, %v2124
  %v2127 = vunpack.c.l.s4 1966171168
  %v2128 = vunpack.c.0.s8 %v2127
  %v2129 = vlaneseq
  %v2130 = vshrl.u32 %v2129, 7
  %v2131 = vsub.s32 %v2128, %v2130
  %v2132 = vrot.slane %v2116, %v2131
  %v2134 = vunpack.c.l.s4 1966171168
  %v2135 = vunpack.c.0.s8 %v2134
  %v2136 = vlaneseq
  %v2137 = vshrl.u32 %v2136, 7
  %v2138 = vsub.s32 %v2135, %v2137
  %v2139 = vrot.slane %v2117, %v2138
  %v2141 = vunpack.c.l.s4 1966171168
  %v2142 = vunpack.c.0.s8 %v2141
  %v2143 = vlaneseq
  %v2144 = vshrl.u32 %v2143, 7
  %v2145 = vsub.s32 %v2142, %v2144
  %v2146 = vrot.slane %v2118, %v2145
  %v2147 = vcombine.high %v2125, %v2125
  %v2148 = vcombine.high %v2132, %v2132
  %v2149 = vcombine.high %v2139, %v2139
  %v2150 = vcombine.high %v2146, %v2146
  %v2151 = vcombine.high %v2067, %v2067
  %v2153 = vunpack.c.l.s4 1966171168
  %v2154 = vunpack.c.0.s8 %v2153
  %v2155 = vlaneseq
  %v2156 = vshrl.u32 %v2155, 7
  %v2157 = vsub.s32 %v2154, %v2156
  %v2158 = vrot.slane %v2067, %v2157
  %v2160 = vunpack.c.l.s4 1966171168
  %v2161 = vunpack.c.0.s8 %v2160
  %v2162 = vlaneseq
  %v2163 = vshrl.u32 %v2162, 7
  %v2164 = vsub.s32 %v2161, %v2163
  %v2165 = vrot.slane %v2151, %v2164
  %v2166 = vcombine.high %v2158, %v2158
  %v2167 = vcombine.high %v2165, %v2165
  %v2169 = vunpack.c.l.s4 1966171168
  %v2170 = vunpack.c.0.s8 %v2169
  %v2171 = vlaneseq
  %v2172 = vshrl.u32 %v2171, 7
  %v2173 = vsub.s32 %v2170, %v2172
  %v2174 = vrot.slane %v2158, %v2173
  %v2176 = vunpack.c.l.s4 1966171168
  %v2177 = vunpack.c.0.s8 %v2176
  %v2178 = vlaneseq
  %v2179 = vshrl.u32 %v2178, 7
  %v2180 = vsub.s32 %v2177, %v2179
  %v2181 = vrot.slane %v2165, %v2180
  %v2183 = vunpack.c.l.s4 1966171168
  %v2184 = vunpack.c.0.s8 %v2183
  %v2185 = vlaneseq
  %v2186 = vshrl.u32 %v2185, 7
  %v2187 = vsub.s32 %v2184, %v2186
  %v2188 = vrot.slane %v2166, %v2187
  %v2190 = vunpack.c.l.s4 1966171168
  %v2191 = vunpack.c.0.s8 %v2190
  %v2192 = vlaneseq
  %v2193 = vshrl.u32 %v2192, 7
  %v2194 = vsub.s32 %v2191, %v2193
  %v2195 = vrot.slane %v2167, %v2194
  %v2196 = vcombine.high %v2174, %v2174
  %v2197 = vcombine.high %v2181, %v2181
  %v2198 = vcombine.high %v2188, %v2188
  %v2199 = vcombine.high %v2195, %v2195
  %v2200 = vcombine.high %v2072, %v2072
  %v2202 = vunpack.c.l.s4 1966171168
  %v2203 = vunpack.c.0.s8 %v2202
  %v2204 = vlaneseq
  %v2205 = vshrl.u32 %v2204, 7
  %v2206 = vsub.s32 %v2203, %v2205
  %v2207 = vrot.slane %v2072, %v2206
  %v2209 = vunpack.c.l.s4 1966171168
  %v2210 = vunpack.c.0.s8 %v2209
  %v2211 = vlaneseq
  %v2212 = vshrl.u32 %v2211, 7
  %v2213 = vsub.s32 %v2210, %v2212
  %v2214 = vrot.slane %v2200, %v2213
  %v2215 = vcombine.high %v2207, %v2207
  %v2216 = vcombine.high %v2214, %v2214
  %v2218 = vunpack.c.l.s4 1966171168
  %v2219 = vunpack.c.0.s8 %v2218
  %v2220 = vlaneseq
  %v2221 = vshrl.u32 %v2220, 7
  %v2222 = vsub.s32 %v2219, %v2221
  %v2223 = vrot.slane %v2207, %v2222
  %v2225 = vunpack.c.l.s4 1966171168
  %v2226 = vunpack.c.0.s8 %v2225
  %v2227 = vlaneseq
  %v2228 = vshrl.u32 %v2227, 7
  %v2229 = vsub.s32 %v2226, %v2228
  %v2230 = vrot.slane %v2214, %v2229
  %v2232 = vunpack.c.l.s4 1966171168
  %v2233 = vunpack.c.0.s8 %v2232
  %v2234 = vlaneseq
  %v2235 = vshrl.u32 %v2234, 7
  %v2236 = vsub.s32 %v2233, %v2235
  %v2237 = vrot.slane %v2215, %v2236
  %v2239 = vunpack.c.l.s4 1966171168
  %v2240 = vunpack.c.0.s8 %v2239
  %v2241 = vlaneseq
  %v2242 = vshrl.u32 %v2241, 7
  %v2243 = vsub.s32 %v2240, %v2242
  %v2244 = vrot.slane %v2216, %v2243
  %v2245 = vcombine.high %v2223, %v2223
  %v2246 = vcombine.high %v2230, %v2230
  %v2247 = vcombine.high %v2237, %v2237
  %v2248 = vcombine.high %v2244, %v2244
  %v2249 = vcombine.high %v2077, %v2077
  %v2251 = vunpack.c.l.s4 1966171168
  %v2252 = vunpack.c.0.s8 %v2251
  %v2253 = vlaneseq
  %v2254 = vshrl.u32 %v2253, 7
  %v2255 = vsub.s32 %v2252, %v2254
  %v2256 = vrot.slane %v2077, %v2255
  %v2258 = vunpack.c.l.s4 1966171168
  %v2259 = vunpack.c.0.s8 %v2258
  %v2260 = vlaneseq
  %v2261 = vshrl.u32 %v2260, 7
  %v2262 = vsub.s32 %v2259, %v2261
  %v2263 = vrot.slane %v2249, %v2262
  %v2264 = vcombine.high %v2256, %v2256
  %v2265 = vcombine.high %v2263, %v2263
  %v2267 = vunpack.c.l.s4 1966171168
  %v2268 = vunpack.c.0.s8 %v2267
  %v2269 = vlaneseq
  %v2270 = vshrl.u32 %v2269, 7
  %v2271 = vsub.s32 %v2268, %v2270
  %v2272 = vrot.slane %v2256, %v2271
  %v2274 = vunpack.c.l.s4 1966171168
  %v2275 = vunpack.c.0.s8 %v2274
  %v2276 = vlaneseq
  %v2277 = vshrl.u32 %v2276, 7
  %v2278 = vsub.s32 %v2275, %v2277
  %v2279 = vrot.slane %v2263, %v2278
  %v2281 = vunpack.c.l.s4 1966171168
  %v2282 = vunpack.c.0.s8 %v2281
  %v2283 = vlaneseq
  %v2284 = vshrl.u32 %v2283, 7
  %v2285 = vsub.s32 %v2282, %v2284
  %v2286 = vrot.slane %v2264, %v2285
  %v2288 = vunpack.c.l.s4 1966171168
  %v2289 = vunpack.c.0.s8 %v2288
  %v2290 = vlaneseq
  %v2291 = vshrl.u32 %v2290, 7
  %v2292 = vsub.s32 %v2289, %v2291
  %v2293 = vrot.slane %v2265, %v2292
  %v2294 = vcombine.high %v2272, %v2272
  %v2295 = vcombine.high %v2279, %v2279
  %v2296 = vcombine.high %v2286, %v2286
  %v2297 = vcombine.high %v2293, %v2293
  %v2298 = vcombine.high %v2082, %v2082
  %v2300 = vunpack.c.l.s4 1966171168
  %v2301 = vunpack.c.0.s8 %v2300
  %v2302 = vlaneseq
  %v2303 = vshrl.u32 %v2302, 7
  %v2304 = vsub.s32 %v2301, %v2303
  %v2305 = vrot.slane %v2082, %v2304
  %v2307 = vunpack.c.l.s4 1966171168
  %v2308 = vunpack.c.0.s8 %v2307
  %v2309 = vlaneseq
  %v2310 = vshrl.u32 %v2309, 7
  %v2311 = vsub.s32 %v2308, %v2310
  %v2312 = vrot.slane %v2298, %v2311
  %v2313 = vcombine.high %v2305, %v2305
  %v2314 = vcombine.high %v2312, %v2312
  %v2316 = vunpack.c.l.s4 1966171168
  %v2317 = vunpack.c.0.s8 %v2316
  %v2318 = vlaneseq
  %v2319 = vshrl.u32 %v2318, 7
  %v2320 = vsub.s32 %v2317, %v2319
  %v2321 = vrot.slane %v2305, %v2320
  %v2323 = vunpack.c.l.s4 1966171168
  %v2324 = vunpack.c.0.s8 %v2323
  %v2325 = vlaneseq
  %v2326 = vshrl.u32 %v2325, 7
  %v2327 = vsub.s32 %v2324, %v2326
  %v2328 = vrot.slane %v2312, %v2327
  %v2330 = vunpack.c.l.s4 1966171168
  %v2331 = vunpack.c.0.s8 %v2330
  %v2332 = vlaneseq
  %v2333 = vshrl.u32 %v2332, 7
  %v2334 = vsub.s32 %v2331, %v2333
  %v2335 = vrot.slane %v2313, %v2334
  %v2337 = vunpack.c.l.s4 1966171168
  %v2338 = vunpack.c.0.s8 %v2337
  %v2339 = vlaneseq
  %v2340 = vshrl.u32 %v2339, 7
  %v2341 = vsub.s32 %v2338, %v2340
  %v2342 = vrot.slane %v2314, %v2341
  %v2343 = vcombine.high %v2321, %v2321
  %v2344 = vcombine.high %v2328, %v2328
  %v2345 = vcombine.high %v2335, %v2335
  %v2346 = vcombine.high %v2342, %v2342
  %v2347 = vcombine.high %v2087, %v2087
  %v2349 = vunpack.c.l.s4 1966171168
  %v2350 = vunpack.c.0.s8 %v2349
  %v2351 = vlaneseq
  %v2352 = vshrl.u32 %v2351, 7
  %v2353 = vsub.s32 %v2350, %v2352
  %v2354 = vrot.slane %v2087, %v2353
  %v2356 = vunpack.c.l.s4 1966171168
  %v2357 = vunpack.c.0.s8 %v2356
  %v2358 = vlaneseq
  %v2359 = vshrl.u32 %v2358, 7
  %v2360 = vsub.s32 %v2357, %v2359
  %v2361 = vrot.slane %v2347, %v2360
  %v2362 = vcombine.high %v2354, %v2354
  %v2363 = vcombine.high %v2361, %v2361
  %v2365 = vunpack.c.l.s4 1966171168
  %v2366 = vunpack.c.0.s8 %v2365
  %v2367 = vlaneseq
  %v2368 = vshrl.u32 %v2367, 7
  %v2369 = vsub.s32 %v2366, %v2368
  %v2370 = vrot.slane %v2354, %v2369
  %v2372 = vunpack.c.l.s4 1966171168
  %v2373 = vunpack.c.0.s8 %v2372
  %v2374 = vlaneseq
  %v2375 = vshrl.u32 %v2374, 7
  %v2376 = vsub.s32 %v2373, %v2375
  %v2377 = vrot.slane %v2361, %v2376
  %v2379 = vunpack.c.l.s4 1966171168
  %v2380 = vunpack.c.0.s8 %v2379
  %v2381 = vlaneseq
  %v2382 = vshrl.u32 %v2381, 7
  %v2383 = vsub.s32 %v2380, %v2382
  %v2384 = vrot.slane %v2362, %v2383
  %v2386 = vunpack.c.l.s4 1966171168
  %v2387 = vunpack.c.0.s8 %v2386
  %v2388 = vlaneseq
  %v2389 = vshrl.u32 %v2388, 7
  %v2390 = vsub.s32 %v2387, %v2389
  %v2391 = vrot.slane %v2363, %v2390
  %v2392 = vcombine.high %v2370, %v2370
  %v2393 = vcombine.high %v2377, %v2377
  %v2394 = vcombine.high %v2384, %v2384
  %v2395 = vcombine.high %v2391, %v2391
  %v2396 = vcombine.high %v2092, %v2092
  %v2398 = vunpack.c.l.s4 1966171168
  %v2399 = vunpack.c.0.s8 %v2398
  %v2400 = vlaneseq
  %v2401 = vshrl.u32 %v2400, 7
  %v2402 = vsub.s32 %v2399, %v2401
  %v2403 = vrot.slane %v2092, %v2402
  %v2405 = vunpack.c.l.s4 1966171168
  %v2406 = vunpack.c.0.s8 %v2405
  %v2407 = vlaneseq
  %v2408 = vshrl.u32 %v2407, 7
  %v2409 = vsub.s32 %v2406, %v2408
  %v2410 = vrot.slane %v2396, %v2409
  %v2411 = vcombine.high %v2403, %v2403
  %v2412 = vcombine.high %v2410, %v2410
  %v2414 = vunpack.c.l.s4 1966171168
  %v2415 = vunpack.c.0.s8 %v2414
  %v2416 = vlaneseq
  %v2417 = vshrl.u32 %v2416, 7
  %v2418 = vsub.s32 %v2415, %v2417
  %v2419 = vrot.slane %v2403, %v2418
  %v2421 = vunpack.c.l.s4 1966171168
  %v2422 = vunpack.c.0.s8 %v2421
  %v2423 = vlaneseq
  %v2424 = vshrl.u32 %v2423, 7
  %v2425 = vsub.s32 %v2422, %v2424
  %v2426 = vrot.slane %v2410, %v2425
  %v2428 = vunpack.c.l.s4 1966171168
  %v2429 = vunpack.c.0.s8 %v2428
  %v2430 = vlaneseq
  %v2431 = vshrl.u32 %v2430, 7
  %v2432 = vsub.s32 %v2429, %v2431
  %v2433 = vrot.slane %v2411, %v2432
  %v2435 = vunpack.c.l.s4 1966171168
  %v2436 = vunpack.c.0.s8 %v2435
  %v2437 = vlaneseq
  %v2438 = vshrl.u32 %v2437, 7
  %v2439 = vsub.s32 %v2436, %v2438
  %v2440 = vrot.slane %v2412, %v2439
  %v2441 = vcombine.high %v2419, %v2419
  %v2442 = vcombine.high %v2426, %v2426
  %v2443 = vcombine.high %v2433, %v2433
  %v2444 = vcombine.high %v2440, %v2440
  %v2445 = vcombine.low %v2125, %v2139
  %v2446 = vcombine.low %v2147, %v2149
  %v2447 = vcombine.low %v2132, %v2146
  %v2449 = vunpack.c.l.s4 1966171168
  %v2450 = vunpack.c.0.s8 %v2449
  %v2451 = vlaneseq
  %v2452 = vshrl.u32 %v2451, 7
  %v2453 = vsub.s32 %v2450, %v2452
  %v2454 = vrot.slane %v2445, %v2453
  %v2456 = vunpack.c.l.s4 1966171168
  %v2457 = vunpack.c.0.s8 %v2456
  %v2458 = vlaneseq
  %v2459 = vshrl.u32 %v2458, 7
  %v2460 = vsub.s32 %v2457, %v2459
  %v2461 = vrot.slane %v2446, %v2460
  %v2463 = vunpack.c.l.s4 1966171168
  %v2464 = vunpack.c.0.s8 %v2463
  %v2465 = vlaneseq
  %v2466 = vshrl.u32 %v2465, 7
  %v2467 = vsub.s32 %v2464, %v2466
  %v2468 = vrot.slane %v2447, %v2467
  %v2470 = vunpack.c.l.s4 1966171168
  %v2471 = vunpack.c.0.s8 %v2470
  %v2472 = vlaneseq
  %v2473 = vshrl.u32 %v2472, 7
  %v2474 = vsub.s32 %v2471, %v2473
  %v2475 = vrot.slane %v2148, %v2474
  %v2476 = vcombine.low %v2454, %v2461
  %v2477 = vcombine.low %v2468, %v2475
  %v2479 = vunpack.c.l.s4 1966171168
  %v2480 = vunpack.c.0.s8 %v2479
  %v2481 = vlaneseq
  %v2482 = vshrl.u32 %v2481, 7
  %v2483 = vsub.s32 %v2480, %v2482
  %v2484 = vrot.slane %v2476, %v2483
  %v2486 = vunpack.c.l.s4 1966171168
  %v2487 = vunpack.c.0.s8 %v2486
  %v2488 = vlaneseq
  %v2489 = vshrl.u32 %v2488, 7
  %v2490 = vsub.s32 %v2487, %v2489
  %v2491 = vrot.slane %v2477, %v2490
  %v2492 = vcombine.low %v2484, %v2491
  %v2493 = vcombine.low %v2150, %v2174
  %v2494 = vcombine.low %v2188, %v2196
  %v2495 = vcombine.low %v2198, %v2181
  %v2497 = vunpack.c.l.s4 1966171168
  %v2498 = vunpack.c.0.s8 %v2497
  %v2499 = vlaneseq
  %v2500 = vshrl.u32 %v2499, 7
  %v2501 = vsub.s32 %v2498, %v2500
  %v2502 = vrot.slane %v2493, %v2501
  %v2504 = vunpack.c.l.s4 1966171168
  %v2505 = vunpack.c.0.s8 %v2504
  %v2506 = vlaneseq
  %v2507 = vshrl.u32 %v2506, 7
  %v2508 = vsub.s32 %v2505, %v2507
  %v2509 = vrot.slane %v2494, %v2508
  %v2511 = vunpack.c.l.s4 1966171168
  %v2512 = vunpack.c.0.s8 %v2511
  %v2513 = vlaneseq
  %v2514 = vshrl.u32 %v2513, 7
  %v2515 = vsub.s32 %v2512, %v2514
  %v2516 = vrot.slane %v2495, %v2515
  %v2518 = vunpack.c.l.s4 1966171168
  %v2519 = vunpack.c.0.s8 %v2518
  %v2520 = vlaneseq
  %v2521 = vshrl.u32 %v2520, 7
  %v2522 = vsub.s32 %v2519, %v2521
  %v2523 = vrot.slane %v2195, %v2522
  %v2524 = vcombine.low %v2502, %v2509
  %v2525 = vcombine.low %v2516, %v2523
  %v2527 = vunpack.c.l.s4 1966171168
  %v2528 = vunpack.c.0.s8 %v2527
  %v2529 = vlaneseq
  %v2530 = vshrl.u32 %v2529, 7
  %v2531 = vsub.s32 %v2528, %v2530
  %v2532 = vrot.slane %v2524, %v2531
  %v2534 = vunpack.c.l.s4 1966171168
  %v2535 = vunpack.c.0.s8 %v2534
  %v2536 = vlaneseq
  %v2537 = vshrl.u32 %v2536, 7
  %v2538 = vsub.s32 %v2535, %v2537
  %v2539 = vrot.slane %v2525, %v2538
  %v2540 = vcombine.low %v2532, %v2539
  %v2541 = vcombine.low %v2197, %v2199
  %v2542 = vcombine.low %v2223, %v2237
  %v2543 = vcombine.low %v2245, %v2247
  %v2545 = vunpack.c.l.s4 1966171168
  %v2546 = vunpack.c.0.s8 %v2545
  %v2547 = vlaneseq
  %v2548 = vshrl.u32 %v2547, 7
  %v2549 = vsub.s32 %v2546, %v2548
  %v2550 = vrot.slane %v2541, %v2549
  %v2552 = vunpack.c.l.s4 1966171168
  %v2553 = vunpack.c.0.s8 %v2552
  %v2554 = vlaneseq
  %v2555 = vshrl.u32 %v2554, 7
  %v2556 = vsub.s32 %v2553, %v2555
  %v2557 = vrot.slane %v2542, %v2556
  %v2559 = vunpack.c.l.s4 1966171168
  %v2560 = vunpack.c.0.s8 %v2559
  %v2561 = vlaneseq
  %v2562 = vshrl.u32 %v2561, 7
  %v2563 = vsub.s32 %v2560, %v2562
  %v2564 = vrot.slane %v2543, %v2563
  %v2566 = vunpack.c.l.s4 1966171168
  %v2567 = vunpack.c.0.s8 %v2566
  %v2568 = vlaneseq
  %v2569 = vshrl.u32 %v2568, 7
  %v2570 = vsub.s32 %v2567, %v2569
  %v2571 = vrot.slane %v2230, %v2570
  %v2572 = vcombine.low %v2550, %v2557
  %v2573 = vcombine.low %v2564, %v2571
  %v2575 = vunpack.c.l.s4 1966171168
  %v2576 = vunpack.c.0.s8 %v2575
  %v2577 = vlaneseq
  %v2578 = vshrl.u32 %v2577, 7
  %v2579 = vsub.s32 %v2576, %v2578
  %v2580 = vrot.slane %v2572, %v2579
  %v2582 = vunpack.c.l.s4 1966171168
  %v2583 = vunpack.c.0.s8 %v2582
  %v2584 = vlaneseq
  %v2585 = vshrl.u32 %v2584, 7
  %v2586 = vsub.s32 %v2583, %v2585
  %v2587 = vrot.slane %v2573, %v2586
  %v2588 = vcombine.low %v2580, %v2587
  %v2589 = vcombine.low %v2244, %v2246
  %v2590 = vcombine.low %v2248, %v2272
  %v2591 = vcombine.low %v2286, %v2294
  %v2593 = vunpack.c.l.s4 1966171168
  %v2594 = vunpack.c.0.s8 %v2593
  %v2595 = vlaneseq
  %v2596 = vshrl.u32 %v2595, 7
  %v2597 = vsub.s32 %v2594, %v2596
  %v2598 = vrot.slane %v2589, %v2597
  %v2600 = vunpack.c.l.s4 1966171168
  %v2601 = vunpack.c.0.s8 %v2600
  %v2602 = vlaneseq
  %v2603 = vshrl.u32 %v2602, 7
  %v2604 = vsub.s32 %v2601, %v2603
  %v2605 = vrot.slane %v2590, %v2604
  %v2607 = vunpack.c.l.s4 1966171168
  %v2608 = vunpack.c.0.s8 %v2607
  %v2609 = vlaneseq
  %v2610 = vshrl.u32 %v2609, 7
  %v2611 = vsub.s32 %v2608, %v2610
  %v2612 = vrot.slane %v2591, %v2611
  %v2614 = vunpack.c.l.s4 1966171168
  %v2615 = vunpack.c.0.s8 %v2614
  %v2616 = vlaneseq
  %v2617 = vshrl.u32 %v2616, 7
  %v2618 = vsub.s32 %v2615, %v2617
  %v2619 = vrot.slane %v2296, %v2618
  %v2620 = vcombine.low %v2598, %v2605
  %v2621 = vcombine.low %v2612, %v2619
  %v2623 = vunpack.c.l.s4 1966171168
  %v2624 = vunpack.c.0.s8 %v2623
  %v2625 = vlaneseq
  %v2626 = vshrl.u32 %v2625, 7
  %v2627 = vsub.s32 %v2624, %v2626
  %v2628 = vrot.slane %v2620, %v2627
  %v2630 = vunpack.c.l.s4 1966171168
  %v2631 = vunpack.c.0.s8 %v2630
  %v2632 = vlaneseq
  %v2633 = vshrl.u32 %v2632, 7
  %v2634 = vsub.s32 %v2631, %v2633
  %v2635 = vrot.slane %v2621, %v2634
  %v2636 = vcombine.low %v2628, %v2635
  %v2637 = vcombine.low %v2279, %v2293
  %v2638 = vcombine.low %v2295, %v2297
  %v2639 = vcombine.low %v2321, %v2335
  %v2641 = vunpack.c.l.s4 1966171168
  %v2642 = vunpack.c.0.s8 %v2641
  %v2643 = vlaneseq
  %v2644 = vshrl.u32 %v2643, 7
  %v2645 = vsub.s32 %v2642, %v2644
  %v2646 = vrot.slane %v2637, %v2645
  %v2648 = vunpack.c.l.s4 1966171168
  %v2649 = vunpack.c.0.s8 %v2648
  %v2650 = vlaneseq
  %v2651 = vshrl.u32 %v2650, 7
  %v2652 = vsub.s32 %v2649, %v2651
  %v2653 = vrot.slane %v2638, %v2652
  %v2655 = vunpack.c.l.s4 1966171168
  %v2656 = vunpack.c.0.s8 %v2655
  %v2657 = vlaneseq
  %v2658 = vshrl.u32 %v2657, 7
  %v2659 = vsub.s32 %v2656, %v2658
  %v2660 = vrot.slane %v2639, %v2659
  %v2662 = vunpack.c.l.s4 1966171168
  %v2663 = vunpack.c.0.s8 %v2662
  %v2664 = vlaneseq
  %v2665 = vshrl.u32 %v2664, 7
  %v2666 = vsub.s32 %v2663, %v2665
  %v2667 = vrot.slane %v2343, %v2666
  %v2668 = vcombine.low %v2646, %v2653
  %v2669 = vcombine.low %v2660, %v2667
  %v2671 = vunpack.c.l.s4 1966171168
  %v2672 = vunpack.c.0.s8 %v2671
  %v2673 = vlaneseq
  %v2674 = vshrl.u32 %v2673, 7
  %v2675 = vsub.s32 %v2672, %v2674
  %v2676 = vrot.slane %v2668, %v2675
  %v2678 = vunpack.c.l.s4 1966171168
  %v2679 = vunpack.c.0.s8 %v2678
  %v2680 = vlaneseq
  %v2681 = vshrl.u32 %v2680, 7
  %v2682 = vsub.s32 %v2679, %v2681
  %v2683 = vrot.slane %v2669, %v2682
  %v2684 = vcombine.low %v2676, %v2683
  %v2685 = vcombine.low %v2345, %v2328
  %v2686 = vcombine.low %v2342, %v2344
  %v2687 = vcombine.low %v2346, %v2370
  %v2689 = vunpack.c.l.s4 1966171168
  %v2690 = vunpack.c.0.s8 %v2689
  %v2691 = vlaneseq
  %v2692 = vshrl.u32 %v2691, 7
  %v2693 = vsub.s32 %v2690, %v2692
  %v2694 = vrot.slane %v2685, %v2693
  %v2696 = vunpack.c.l.s4 1966171168
  %v2697 = vunpack.c.0.s8 %v2696
  %v2698 = vlaneseq
  %v2699 = vshrl.u32 %v2698, 7
  %v2700 = vsub.s32 %v2697, %v2699
  %v2701 = vrot.slane %v2686, %v2700
  %v2703 = vunpack.c.l.s4 1966171168
  %v2704 = vunpack.c.0.s8 %v2703
  %v2705 = vlaneseq
  %v2706 = vshrl.u32 %v2705, 7
  %v2707 = vsub.s32 %v2704, %v2706
  %v2708 = vrot.slane %v2687, %v2707
  %v2710 = vunpack.c.l.s4 1966171168
  %v2711 = vunpack.c.0.s8 %v2710
  %v2712 = vlaneseq
  %v2713 = vshrl.u32 %v2712, 7
  %v2714 = vsub.s32 %v2711, %v2713
  %v2715 = vrot.slane %v2384, %v2714
  %v2716 = vcombine.low %v2694, %v2701
  %v2717 = vcombine.low %v2708, %v2715
  %v2719 = vunpack.c.l.s4 1966171168
  %v2720 = vunpack.c.0.s8 %v2719
  %v2721 = vlaneseq
  %v2722 = vshrl.u32 %v2721, 7
  %v2723 = vsub.s32 %v2720, %v2722
  %v2724 = vrot.slane %v2716, %v2723
  %v2726 = vunpack.c.l.s4 1966171168
  %v2727 = vunpack.c.0.s8 %v2726
  %v2728 = vlaneseq
  %v2729 = vshrl.u32 %v2728, 7
  %v2730 = vsub.s32 %v2727, %v2729
  %v2731 = vrot.slane %v2717, %v2730
  %v2732 = vcombine.low %v2724, %v2731
  %v2733 = vcombine.low %v2392, %v2394
  %v2734 = vcombine.low %v2377, %v2391
  %v2735 = vcombine.low %v2393, %v2395
  %v2737 = vunpack.c.l.s4 1966171168
  %v2738 = vunpack.c.0.s8 %v2737
  %v2739 = vlaneseq
  %v2740 = vshrl.u32 %v2739, 7
  %v2741 = vsub.s32 %v2738, %v2740
  %v2742 = vrot.slane %v2733, %v2741
  %v2744 = vunpack.c.l.s4 1966171168
  %v2745 = vunpack.c.0.s8 %v2744
  %v2746 = vlaneseq
  %v2747 = vshrl.u32 %v2746, 7
  %v2748 = vsub.s32 %v2745, %v2747
  %v2749 = vrot.slane %v2734, %v2748
  %v2751 = vunpack.c.l.s4 1966171168
  %v2752 = vunpack.c.0.s8 %v2751
  %v2753 = vlaneseq
  %v2754 = vshrl.u32 %v2753, 7
  %v2755 = vsub.s32 %v2752, %v2754
  %v2756 = vrot.slane %v2735, %v2755
  %v2758 = vunpack.c.l.s4 1966171168
  %v2759 = vunpack.c.0.s8 %v2758
  %v2760 = vlaneseq
  %v2761 = vshrl.u32 %v2760, 7
  %v2762 = vsub.s32 %v2759, %v2761
  %v2763 = vrot.slane %v2419, %v2762
  %v2764 = vcombine.low %v2742, %v2749
  %v2765 = vcombine.low %v2756, %v2763
  %v2767 = vunpack.c.l.s4 1966171168
  %v2768 = vunpack.c.0.s8 %v2767
  %v2769 = vlaneseq
  %v2770 = vshrl.u32 %v2769, 7
  %v2771 = vsub.s32 %v2768, %v2770
  %v2772 = vrot.slane %v2764, %v2771
  %v2774 = vunpack.c.l.s4 1966171168
  %v2775 = vunpack.c.0.s8 %v2774
  %v2776 = vlaneseq
  %v2777 = vshrl.u32 %v2776, 7
  %v2778 = vsub.s32 %v2775, %v2777
  %v2779 = vrot.slane %v2765, %v2778
  %v2780 = vcombine.low %v2772, %v2779
  %v2781 = vcombine.low %v2433, %v2441
  %v2782 = vcombine.low %v2443, %v2426
  %v2783 = vcombine.low %v2440, %v2442
  %v2785 = vunpack.c.l.s4 1966171168
  %v2786 = vunpack.c.0.s8 %v2785
  %v2787 = vlaneseq
  %v2788 = vshrl.u32 %v2787, 7
  %v2789 = vsub.s32 %v2786, %v2788
  %v2790 = vrot.slane %v2781, %v2789
  %v2792 = vunpack.c.l.s4 1966171168
  %v2793 = vunpack.c.0.s8 %v2792
  %v2794 = vlaneseq
  %v2795 = vshrl.u32 %v2794, 7
  %v2796 = vsub.s32 %v2793, %v2795
  %v2797 = vrot.slane %v2782, %v2796
  %v2799 = vunpack.c.l.s4 1966171168
  %v2800 = vunpack.c.0.s8 %v2799
  %v2801 = vlaneseq
  %v2802 = vshrl.u32 %v2801, 7
  %v2803 = vsub.s32 %v2800, %v2802
  %v2804 = vrot.slane %v2783, %v2803
  %v2806 = vunpack.c.l.s4 1966171168
  %v2807 = vunpack.c.0.s8 %v2806
  %v2808 = vlaneseq
  %v2809 = vshrl.u32 %v2808, 7
  %v2810 = vsub.s32 %v2807, %v2809
  %v2811 = vrot.slane %v2444, %v2810
  %v2812 = vcombine.low %v2790, %v2797
  %v2813 = vcombine.low %v2804, %v2811
  %v2815 = vunpack.c.l.s4 1966171168
  %v2816 = vunpack.c.0.s8 %v2815
  %v2817 = vlaneseq
  %v2818 = vshrl.u32 %v2817, 7
  %v2819 = vsub.s32 %v2816, %v2818
  %v2820 = vrot.slane %v2812, %v2819
  %v2822 = vunpack.c.l.s4 1966171168
  %v2823 = vunpack.c.0.s8 %v2822
  %v2824 = vlaneseq
  %v2825 = vshrl.u32 %v2824, 7
  %v2826 = vsub.s32 %v2823, %v2825
  %v2827 = vrot.slane %v2813, %v2826
  %v2828 = vcombine.low %v2820, %v2827
  %vm2837 = vcmask 30720
  %v2838 = vsel %vm2837, %v2492, -inf
  %v2839 = vrot.slane %v2838, 4
  %v2840 = vmax.f32 %v2838, %v2839
  %v2841 = vrot.slane %v2840, 2
  %v2842 = vmax.f32 %v2840, %v2841
  %v2843 = vrot.slane %v2842, 1
  %v2844 = vmax.f32 %v2842, %v2843
  %v2845 = vsel %vm2837, %v2540, -inf
  %v2846 = vrot.slane %v2845, 4
  %v2847 = vmax.f32 %v2845, %v2846
  %v2848 = vrot.slane %v2847, 2
  %v2849 = vmax.f32 %v2847, %v2848
  %v2850 = vrot.slane %v2849, 1
  %v2851 = vmax.f32 %v2849, %v2850
  %v2852 = vsel %vm2837, %v2588, -inf
  %v2853 = vrot.slane %v2852, 4
  %v2854 = vmax.f32 %v2852, %v2853
  %v2855 = vrot.slane %v2854, 2
  %v2856 = vmax.f32 %v2854, %v2855
  %v2857 = vrot.slane %v2856, 1
  %v2858 = vmax.f32 %v2856, %v2857
  %v2859 = vsel %vm2837, %v2636, -inf
  %v2860 = vrot.slane %v2859, 4
  %v2861 = vmax.f32 %v2859, %v2860
  %v2862 = vrot.slane %v2861, 2
  %v2863 = vmax.f32 %v2861, %v2862
  %v2864 = vrot.slane %v2863, 1
  %v2865 = vmax.f32 %v2863, %v2864
  %v2866 = vsel %vm2837, %v2684, -inf
  %v2867 = vrot.slane %v2866, 4
  %v2868 = vmax.f32 %v2866, %v2867
  %v2869 = vrot.slane %v2868, 2
  %v2870 = vmax.f32 %v2868, %v2869
  %v2871 = vrot.slane %v2870, 1
  %v2872 = vmax.f32 %v2870, %v2871
  %v2873 = vsel %vm2837, %v2732, -inf
  %v2874 = vrot.slane %v2873, 4
  %v2875 = vmax.f32 %v2873, %v2874
  %v2876 = vrot.slane %v2875, 2
  %v2877 = vmax.f32 %v2875, %v2876
  %v2878 = vrot.slane %v2877, 1
  %v2879 = vmax.f32 %v2877, %v2878
  %v2880 = vsel %vm2837, %v2780, -inf
  %v2881 = vrot.slane %v2880, 4
  %v2882 = vmax.f32 %v2880, %v2881
  %v2883 = vrot.slane %v2882, 2
  %v2884 = vmax.f32 %v2882, %v2883
  %v2885 = vrot.slane %v2884, 1
  %v2886 = vmax.f32 %v2884, %v2885
  %v2887 = vsel %vm2837, %v2828, -inf
  %v2888 = vrot.slane %v2887, 4
  %v2889 = vmax.f32 %v2887, %v2888
  %v2890 = vrot.slane %v2889, 2
  %v2891 = vmax.f32 %v2889, %v2890
  %v2892 = vrot.slane %v2891, 1
  %v2893 = vmax.f32 %v2891, %v2892
  %v2895 = vunpack.c.l.s4 1966171168
  %v2896 = vunpack.c.0.s8 %v2895
  %v2897 = vlaneseq
  %v2898 = vshrl.u32 %v2897, 7
  %v2899 = vsub.s32 %v2896, %v2898
  %v2900 = vrot.slane %v2468, %v2899
  %v2901 = vcombine.low %v2484, %v2900
  %v2903 = vunpack.c.l.s4 1966171168
  %v2904 = vunpack.c.0.s8 %v2903
  %v2905 = vlaneseq
  %v2906 = vshrl.u32 %v2905, 7
  %v2907 = vsub.s32 %v2904, %v2906
  %v2908 = vrot.slane %v2516, %v2907
  %v2909 = vcombine.low %v2532, %v2908
  %v2911 = vunpack.c.l.s4 1966171168
  %v2912 = vunpack.c.0.s8 %v2911
  %v2913 = vlaneseq
  %v2914 = vshrl.u32 %v2913, 7
  %v2915 = vsub.s32 %v2912, %v2914
  %v2916 = vrot.slane %v2564, %v2915
  %v2917 = vcombine.low %v2580, %v2916
  %v2919 = vunpack.c.l.s4 1966171168
  %v2920 = vunpack.c.0.s8 %v2919
  %v2921 = vlaneseq
  %v2922 = vshrl.u32 %v2921, 7
  %v2923 = vsub.s32 %v2920, %v2922
  %v2924 = vrot.slane %v2612, %v2923
  %v2925 = vcombine.low %v2628, %v2924
  %v2927 = vunpack.c.l.s4 1966171168
  %v2928 = vunpack.c.0.s8 %v2927
  %v2929 = vlaneseq
  %v2930 = vshrl.u32 %v2929, 7
  %v2931 = vsub.s32 %v2928, %v2930
  %v2932 = vrot.slane %v2660, %v2931
  %v2933 = vcombine.low %v2676, %v2932
  %v2935 = vunpack.c.l.s4 1966171168
  %v2936 = vunpack.c.0.s8 %v2935
  %v2937 = vlaneseq
  %v2938 = vshrl.u32 %v2937, 7
  %v2939 = vsub.s32 %v2936, %v2938
  %v2940 = vrot.slane %v2708, %v2939
  %v2941 = vcombine.low %v2724, %v2940
  %v2943 = vunpack.c.l.s4 1966171168
  %v2944 = vunpack.c.0.s8 %v2943
  %v2945 = vlaneseq
  %v2946 = vshrl.u32 %v2945, 7
  %v2947 = vsub.s32 %v2944, %v2946
  %v2948 = vrot.slane %v2756, %v2947
  %v2949 = vcombine.low %v2772, %v2948
  %v2951 = vunpack.c.l.s4 1966171168
  %v2952 = vunpack.c.0.s8 %v2951
  %v2953 = vlaneseq
  %v2954 = vshrl.u32 %v2953, 7
  %v2955 = vsub.s32 %v2952, %v2954
  %v2956 = vrot.slane %v2804, %v2955
  %v2957 = vcombine.low %v2820, %v2956
  %vm2966 = vcmask 62496
  %v2967 = vsel %vm2966, %v2901, -inf
  %v2968 = vrot.slane %v2967, 4
  %v2969 = vmax.f32 %v2967, %v2968
  %v2970 = vrot.slane %v2969, 2
  %v2971 = vmax.f32 %v2969, %v2970
  %v2972 = vrot.slane %v2971, 1
  %v2973 = vmax.f32 %v2971, %v2972
  %v2974 = vsel %vm2966, %v2909, -inf
  %v2975 = vrot.slane %v2974, 4
  %v2976 = vmax.f32 %v2974, %v2975
  %v2977 = vrot.slane %v2976, 2
  %v2978 = vmax.f32 %v2976, %v2977
  %v2979 = vrot.slane %v2978, 1
  %v2980 = vmax.f32 %v2978, %v2979
  %v2981 = vsel %vm2966, %v2917, -inf
  %v2982 = vrot.slane %v2981, 4
  %v2983 = vmax.f32 %v2981, %v2982
  %v2984 = vrot.slane %v2983, 2
  %v2985 = vmax.f32 %v2983, %v2984
  %v2986 = vrot.slane %v2985, 1
  %v2987 = vmax.f32 %v2985, %v2986
  %v2988 = vsel %vm2966, %v2925, -inf
  %v2989 = vrot.slane %v2988, 4
  %v2990 = vmax.f32 %v2988, %v2989
  %v2991 = vrot.slane %v2990, 2
  %v2992 = vmax.f32 %v2990, %v2991
  %v2993 = vrot.slane %v2992, 1
  %v2994 = vmax.f32 %v2992, %v2993
  %v2995 = vsel %vm2966, %v2933, -inf
  %v2996 = vrot.slane %v2995, 4
  %v2997 = vmax.f32 %v2995, %v2996
  %v2998 = vrot.slane %v2997, 2
  %v2999 = vmax.f32 %v2997, %v2998
  %v3000 = vrot.slane %v2999, 1
  %v3001 = vmax.f32 %v2999, %v3000
  %v3002 = vsel %vm2966, %v2941, -inf
  %v3003 = vrot.slane %v3002, 4
  %v3004 = vmax.f32 %v3002, %v3003
  %v3005 = vrot.slane %v3004, 2
  %v3006 = vmax.f32 %v3004, %v3005
  %v3007 = vrot.slane %v3006, 1
  %v3008 = vmax.f32 %v3006, %v3007
  %v3009 = vsel %vm2966, %v2949, -inf
  %v3010 = vrot.slane %v3009, 4
  %v3011 = vmax.f32 %v3009, %v3010
  %v3012 = vrot.slane %v3011, 2
  %v3013 = vmax.f32 %v3011, %v3012
  %v3014 = vrot.slane %v3013, 1
  %v3015 = vmax.f32 %v3013, %v3014
  %v3016 = vsel %vm2966, %v2957, -inf
  %v3017 = vrot.slane %v3016, 4
  %v3018 = vmax.f32 %v3016, %v3017
  %v3019 = vrot.slane %v3018, 2
  %v3020 = vmax.f32 %v3018, %v3019
  %v3021 = vrot.slane %v3020, 1
  %v3022 = vmax.f32 %v3020, %v3021
  %v3024 = vunpack.c.l.s4 1966171168
  %v3025 = vunpack.c.0.s8 %v3024
  %v3026 = vlaneseq
  %v3027 = vshrl.u32 %v3026, 7
  %v3028 = vsub.s32 %v3025, %v3027
  %v3029 = vrot.slane %v2132, %v3028
  %v3031 = vunpack.c.l.s4 1966171168
  %v3032 = vunpack.c.0.s8 %v3031
  %v3033 = vlaneseq
  %v3034 = vshrl.u32 %v3033, 7
  %v3035 = vsub.s32 %v3032, %v3034
  %v3036 = vrot.slane %v3029, %v3035
  %v3037 = vcombine.low %v2484, %v3036
  %v3039 = vunpack.c.l.s4 1966171168
  %v3040 = vunpack.c.0.s8 %v3039
  %v3041 = vlaneseq
  %v3042 = vshrl.u32 %v3041, 7
  %v3043 = vsub.s32 %v3040, %v3042
  %v3044 = vrot.slane %v2198, %v3043
  %v3046 = vunpack.c.l.s4 1966171168
  %v3047 = vunpack.c.0.s8 %v3046
  %v3048 = vlaneseq
  %v3049 = vshrl.u32 %v3048, 7
  %v3050 = vsub.s32 %v3047, %v3049
  %v3051 = vrot.slane %v3044, %v3050
  %v3052 = vcombine.low %v2532, %v3051
  %v3054 = vunpack.c.l.s4 1966171168
  %v3055 = vunpack.c.0.s8 %v3054
  %v3056 = vlaneseq
  %v3057 = vshrl.u32 %v3056, 7
  %v3058 = vsub.s32 %v3055, %v3057
  %v3059 = vrot.slane %v2245, %v3058
  %v3061 = vunpack.c.l.s4 1966171168
  %v3062 = vunpack.c.0.s8 %v3061
  %v3063 = vlaneseq
  %v3064 = vshrl.u32 %v3063, 7
  %v3065 = vsub.s32 %v3062, %v3064
  %v3066 = vrot.slane %v3059, %v3065
  %v3067 = vcombine.low %v2580, %v3066
  %v3069 = vunpack.c.l.s4 1966171168
  %v3070 = vunpack.c.0.s8 %v3069
  %v3071 = vlaneseq
  %v3072 = vshrl.u32 %v3071, 7
  %v3073 = vsub.s32 %v3070, %v3072
  %v3074 = vrot.slane %v2286, %v3073
  %v3076 = vunpack.c.l.s4 1966171168
  %v3077 = vunpack.c.0.s8 %v3076
  %v3078 = vlaneseq
  %v3079 = vshrl.u32 %v3078, 7
  %v3080 = vsub.s32 %v3077, %v3079
  %v3081 = vrot.slane %v3074, %v3080
  %v3082 = vcombine.low %v2628, %v3081
  %v3084 = vunpack.c.l.s4 1966171168
  %v3085 = vunpack.c.0.s8 %v3084
  %v3086 = vlaneseq
  %v3087 = vshrl.u32 %v3086, 7
  %v3088 = vsub.s32 %v3085, %v3087
  %v3089 = vrot.slane %v2321, %v3088
  %v3091 = vunpack.c.l.s4 1966171168
  %v3092 = vunpack.c.0.s8 %v3091
  %v3093 = vlaneseq
  %v3094 = vshrl.u32 %v3093, 7
  %v3095 = vsub.s32 %v3092, %v3094
  %v3096 = vrot.slane %v3089, %v3095
  %v3097 = vcombine.low %v2676, %v3096
  %v3099 = vunpack.c.l.s4 1966171168
  %v3100 = vunpack.c.0.s8 %v3099
  %v3101 = vlaneseq
  %v3102 = vshrl.u32 %v3101, 7
  %v3103 = vsub.s32 %v3100, %v3102
  %v3104 = vrot.slane %v2346, %v3103
  %v3106 = vunpack.c.l.s4 1966171168
  %v3107 = vunpack.c.0.s8 %v3106
  %v3108 = vlaneseq
  %v3109 = vshrl.u32 %v3108, 7
  %v3110 = vsub.s32 %v3107, %v3109
  %v3111 = vrot.slane %v3104, %v3110
  %v3112 = vcombine.low %v2724, %v3111
  %v3114 = vunpack.c.l.s4 1966171168
  %v3115 = vunpack.c.0.s8 %v3114
  %v3116 = vlaneseq
  %v3117 = vshrl.u32 %v3116, 7
  %v3118 = vsub.s32 %v3115, %v3117
  %v3119 = vrot.slane %v2393, %v3118
  %v3121 = vunpack.c.l.s4 1966171168
  %v3122 = vunpack.c.0.s8 %v3121
  %v3123 = vlaneseq
  %v3124 = vshrl.u32 %v3123, 7
  %v3125 = vsub.s32 %v3122, %v3124
  %v3126 = vrot.slane %v3119, %v3125
  %v3127 = vcombine.low %v2772, %v3126
  %v3129 = vunpack.c.l.s4 1966171168
  %v3130 = vunpack.c.0.s8 %v3129
  %v3131 = vlaneseq
  %v3132 = vshrl.u32 %v3131, 7
  %v3133 = vsub.s32 %v3130, %v3132
  %v3134 = vrot.slane %v2440, %v3133
  %v3136 = vunpack.c.l.s4 1966171168
  %v3137 = vunpack.c.0.s8 %v3136
  %v3138 = vlaneseq
  %v3139 = vshrl.u32 %v3138, 7
  %v3140 = vsub.s32 %v3137, %v3139
  %v3141 = vrot.slane %v3134, %v3140
  %v3142 = vcombine.low %v2820, %v3141
  %vm3151 = vcmask 94272
  %v3152 = vsel %vm3151, %v3037, -inf
  %v3153 = vrot.slane %v3152, 4
  %v3154 = vmax.f32 %v3152, %v3153
  %v3155 = vrot.slane %v3154, 2
  %v3156 = vmax.f32 %v3154, %v3155
  %v3157 = vrot.slane %v3156, 1
  %v3158 = vmax.f32 %v3156, %v3157
  %v3159 = vsel %vm3151, %v3052, -inf
  %v3160 = vrot.slane %v3159, 4
  %v3161 = vmax.f32 %v3159, %v3160
  %v3162 = vrot.slane %v3161, 2
  %v3163 = vmax.f32 %v3161, %v3162
  %v3164 = vrot.slane %v3163, 1
  %v3165 = vmax.f32 %v3163, %v3164
  %v3166 = vsel %vm3151, %v3067, -inf
  %v3167 = vrot.slane %v3166, 4
  %v3168 = vmax.f32 %v3166, %v3167
  %v3169 = vrot.slane %v3168, 2
  %v3170 = vmax.f32 %v3168, %v3169
  %v3171 = vrot.slane %v3170, 1
  %v3172 = vmax.f32 %v3170, %v3171
  %v3173 = vsel %vm3151, %v3082, -inf
  %v3174 = vrot.slane %v3173, 4
  %v3175 = vmax.f32 %v3173, %v3174
  %v3176 = vrot.slane %v3175, 2
  %v3177 = vmax.f32 %v3175, %v3176
  %v3178 = vrot.slane %v3177, 1
  %v3179 = vmax.f32 %v3177, %v3178
  %v3180 = vsel %vm3151, %v3097, -inf
  %v3181 = vrot.slane %v3180, 4
  %v3182 = vmax.f32 %v3180, %v3181
  %v3183 = vrot.slane %v3182, 2
  %v3184 = vmax.f32 %v3182, %v3183
  %v3185 = vrot.slane %v3184, 1
  %v3186 = vmax.f32 %v3184, %v3185
  %v3187 = vsel %vm3151, %v3112, -inf
  %v3188 = vrot.slane %v3187, 4
  %v3189 = vmax.f32 %v3187, %v3188
  %v3190 = vrot.slane %v3189, 2
  %v3191 = vmax.f32 %v3189, %v3190
  %v3192 = vrot.slane %v3191, 1
  %v3193 = vmax.f32 %v3191, %v3192
  %v3194 = vsel %vm3151, %v3127, -inf
  %v3195 = vrot.slane %v3194, 4
  %v3196 = vmax.f32 %v3194, %v3195
  %v3197 = vrot.slane %v3196, 2
  %v3198 = vmax.f32 %v3196, %v3197
  %v3199 = vrot.slane %v3198, 1
  %v3200 = vmax.f32 %v3198, %v3199
  %v3201 = vsel %vm3151, %v3142, -inf
  %v3202 = vrot.slane %v3201, 4
  %v3203 = vmax.f32 %v3201, %v3202
  %v3204 = vrot.slane %v3203, 2
  %v3205 = vmax.f32 %v3203, %v3204
  %v3206 = vrot.slane %v3205, 1
  %v3207 = vmax.f32 %v3205, %v3206
  %vm3216 = vcmask 1041409
  %v3217 = vsel %vm3216, %v2851, %v2844
  %vm3218 = vcmask 1042434
  %v3219 = vsel %vm3218, %v2858, %v3217
  %vm3220 = vcmask 1043459
  %v3221 = vsel %vm3220, %v2865, %v3219
  %vm3222 = vcmask 1044484
  %v3223 = vsel %vm3222, %v2872, %v3221
  %vm3224 = vcmask 1045509
  %v3225 = vsel %vm3224, %v2879, %v3223
  %vm3226 = vcmask 1046534
  %v3227 = vsel %vm3226, %v2886, %v3225
  %vm3228 = vcmask 1047559
  %v3229 = vsel %vm3228, %v2893, %v3227
  %v3239 = vsel %vm3216, %v2980, %v2973
  %v3240 = vsel %vm3218, %v2987, %v3239
  %v3241 = vsel %vm3220, %v2994, %v3240
  %v3242 = vsel %vm3222, %v3001, %v3241
  %v3243 = vsel %vm3224, %v3008, %v3242
  %v3244 = vsel %vm3226, %v3015, %v3243
  %v3245 = vsel %vm3228, %v3022, %v3244
  %v3255 = vsel %vm3216, %v3165, %v3158
  %v3256 = vsel %vm3218, %v3172, %v3255
  %v3257 = vsel %vm3220, %v3179, %v3256
  %v3258 = vsel %vm3222, %v3186, %v3257
  %v3259 = vsel %vm3224, %v3193, %v3258
  %v3260 = vsel %vm3226, %v3200, %v3259
  %v3261 = vsel %vm3228, %v3207, %v3260
  %vm3263 = vcmask 31744
  %v3264 = vsel %vm3263, %v3229, %v3245
  %vm3265 = vcmask 64512
  %v3266 = vsel %vm3265, %v3264, %v3261
  %v3267 = vld [vmem:[%s3] sm:$0x1]
  %v3269 = vlaneseq
  %v3270 = vshrl.u32 %v3269, 7
  %v3271 = vsub.s32 0, %v3270
  %v3272 = vrot.slane %v3267, %v3271
  %v3274 = vadd.f32 %v3266, %v3272
  %v3275 = vmax.f32 %v3274, 0.0
  %v3276 = vld [vmem:[%s4] sm:$0xff]
  %v3277 = vld [vmem:[%s4 + $0x8] sm:$0xf]
  %v3278 = vld [vmem:[%s5] sm:$0x1]
  %v3280 = vlaneseq
  %v3281 = vshrl.u32 %v3280, 7
  %v3282 = vsub.s32 0, %v3281
  %v3283 = vrot.slane %v3278, %v3282
  %vm3285 = vcmask 97280
  %v3287 = vsel %vm3285, %v3275, 0
  %vm3289 = vcmask 1043456
  %v3291 = vsel %vm3289, %v3277, 0
  %3293 = vmatprep.subr.mxu0 0.0
  %3294 = vmatpush1.msra.mxu0 0.0
  %3295 = vmatprep.subr.mxu0 0.0
  %3296 = vmatpush1.msra.mxu0 0.0
  %3297 = vmatprep.subr.mxu0 0.0
  %3298 = vmatpush1.msra.mxu0 0.0
  %3299 = vmatprep.subr.mxu0 0.0
  %3300 = vmatpush1.msra.mxu0 0.0
  %3301 = vmatprep.subr.mxu0 0.0
  %3302 = vmatpush1.msra.mxu0 0.0
  %3303 = vmatprep.subr.mxu0 0.0
  %3304 = vmatpush1.msra.mxu0 0.0
  %3305 = vmatprep.subr.mxu0 0.0
  %3306 = vmatpush1.msra.mxu0 0.0
  %3307 = vmatprep.subr.mxu0 0.0
  %3308 = vmatpush1.msra.mxu0 0.0
  %3309 = vmatprep.subr.mxu0 0.0
  %3310 = vmatpush1.msra.mxu0 0.0
  %3311 = vmatprep.subr.mxu0 0.0
  %3312 = vmatpush1.msra.mxu0 0.0
  %3313 = vmatprep.subr.mxu0 0.0
  %3314 = vmatpush1.msra.mxu0 0.0
  %3315 = vmatprep.subr.mxu0 0.0
  %3316 = vmatpush1.msra.mxu0 0.0
  %3317 = vmatprep.subr.mxu0 0.0
  %3318 = vmatpush1.msra.mxu0 0.0
  %3319 = vmatprep.subr.mxu0 0.0
  %3320 = vmatpush1.msra.mxu0 0.0
  %3321 = vmatprep.subr.mxu0 0.0
  %3322 = vmatpush1.msra.mxu0 %v3291
  %3323 = vmatprep.subr.mxu0 0.0
  %3324 = vmatpush1.msra.mxu0 %v3276
  %3325 = vmatprep.subr.mxu0 0.0
  %3326 = vmatpush2.msra.mxu0 0.0
  %3327 = vmatprep.subr.mxu0 0.0
  %3328 = vmatpush2.msra.mxu0 0.0
  %3329 = vmatprep.subr.mxu0 0.0
  %3330 = vmatpush2.msra.mxu0 0.0
  %3331 = vmatprep.subr.mxu0 0.0
  %3332 = vmatpush2.msra.mxu0 0.0
  %3333 = vmatprep.subr.mxu0 0.0
  %3334 = vmatpush2.msra.mxu0 0.0
  %3335 = vmatprep.subr.mxu0 0.0
  %3336 = vmatpush2.msra.mxu0 0.0
  %3337 = vmatprep.subr.mxu0 0.0
  %3338 = vmatpush2.msra.mxu0 0.0
  %3339 = vmatprep.subr.mxu0 0.0
  %3340 = vmatpush2.msra.mxu0 0.0
  %3341 = vmatprep.subr.mxu0 0.0
  %3342 = vmatpush2.msra.mxu0 0.0
  %3343 = vmatprep.subr.mxu0 0.0
  %3344 = vmatpush2.msra.mxu0 0.0
  %3345 = vmatprep.subr.mxu0 0.0
  %3346 = vmatpush2.msra.mxu0 0.0
  %3347 = vmatprep.subr.mxu0 0.0
  %3348 = vmatpush2.msra.mxu0 0.0
  %3349 = vmatprep.subr.mxu0 0.0
  %3350 = vmatpush2.msra.mxu0 0.0
  %3351 = vmatprep.subr.mxu0 0.0
  %3352 = vmatpush2.msra.mxu0 0.0
  %3353 = vmatprep.subr.mxu0 0.0
  %3354 = vmatpush2.msra.mxu0 0.0
  %3355 = vmatprep.subr.mxu0 0.0
  %3356 = vmatpush2.msra.mxu0 0.0
  %3357 = vmatprep.mubr.f32.mxu0 0.0
  %3358 = vmatmul.mubr.f32.gmra.mxu0 %v3287
  %v3359 = vpop.f32.mrf.mxu0
  %v3360 = vadd.f32 %v3283, %v3359
  %v3361 = vpop.f32.mrf.mxu0
  %3362 = vdwg.mxu0
  %3363 = vmax.xlane.f32.xlu0 %v3360
  %v3364 = vpop.xlane.xlu0 %3363
  %v3365 = vsub.f32 %v3360, %v3364
  %v3366 = vmul.f32 %v3365, 1.442695
  %v3367 = vpow.pop %v3366
  %3368 = vadd.xlane.f32.xlu0 %v3367
  %v3369 = vpop.xlane.xlu0 %3368
  %v3370 = vlog2.pop %v3369
  %v3371 = vmul.f32 %v3370, 0.6931472
  %v3372 = vadd.f32 %v3364, %v3371
  %v3373 = vsub.f32 %v3360, %v3372
  %3374 = vst [vmem:[%s6] sm:$0xff] %v3373
  // Predicated region
  $region26: #{cnn_classifier_forward.1} parent=0 // pred_check
    _
  $region27: #{cnn_classifier_forward.1} parent=0 // pred_check_branch
    %3376 = sbr.rel (0) target = $region29
  $region28: #{cnn_classifier_forward.1} parent=0 // pred_region
    _
  $region29: #{cnn_classifier_forward.1} parent=0 // pred_fallthru
    _
  // Predicated region
  $region30: #{cnn_classifier_forward.1} parent=0 // pred_check
    _
  $region31: #{cnn_classifier_forward.1} parent=0 // pred_check_branch
    %3378 = sbr.rel (0) target = $region33
  $region32: #{cnn_classifier_forward.1} parent=0 // pred_region
    _
  $region33: #{cnn_classifier_forward.1} parent=0 // pred_fallthru
    _

</llo_original>
